<compile_context>
chip_gen: v5e
topology: v5e:2x2
jax: 0.10.0
libtpu: 0.0.40
codegen_flags: <defaults>
</compile_context>

<pallas_src>
import functools

import jax
import jax.numpy as jnp
import numpy as np
from jax.experimental import pallas as pl
from jax.experimental.pallas import tpu as pltpu


def _round_up(x, m):
    return (x + m - 1) // m * m


def _pad2(w, rows, cols):
    """Zero-pad a 2-D matrix to (rows, cols)."""
    return jnp.zeros((rows, cols), w.dtype).at[:w.shape[0], :w.shape[1]].set(w)


def _pad_row(b, cols):
    """Zero-pad a 1-D bias to a (1, cols) row."""
    return jnp.zeros((1, cols), b.dtype).at[0, :b.shape[0]].set(b)


def _pad_gate_matrix(w_t, H, Hp):
    """(K, 3H) with gate blocks along columns -> (Hp, 3Hp), each gate block
    placed at columns [g*Hp, g*Hp+H) so gate slices are lane-tile aligned."""
    K = w_t.shape[0]
    out = jnp.zeros((Hp, 3 * Hp), w_t.dtype)
    for g in range(3):
        out = out.at[:K, g * Hp:g * Hp + H].set(w_t[:, g * H:(g + 1) * H])
    return out


def _pad_gate_bias(b, H, Hp):
    """(3H,) gate bias -> (1, 3Hp) with per-gate placement."""
    out = jnp.zeros((1, 3 * Hp), b.dtype)
    for g in range(3):
        out = out.at[0, g * Hp:g * Hp + H].set(b[g * H:(g + 1) * H])
    return out


def _gnn_kernel(a_in_ref, a_out_ref, h_ref,
                w_ein_ref, b_ein_ref, w_eout_ref, b_eout_ref,
                b_iah_ref, b_oah_ref,
                w_ih_in_ref, w_ih_out_ref, b_ih_ref,
                w_hh_ref, b_hh_ref,
                out_ref, *, step, hidden_pad, matmul_dtype):
    """TB sessions per grid step: runs `step` GRU-style GNN cells on a
    (TB, N, Hp) hidden block, doing node-wise matmuls on a (TB*N, Hp) slab."""
    Hp = hidden_pad
    TB, N, _ = h_ref.shape
    rows = TB * N
    mm = matmul_dtype

    a_in = a_in_ref[...]                       # (TB, N, N) f32
    a_out = a_out_ref[...]
    h = h_ref[...].reshape(rows, Hp)           # (rows, Hp) f32 slab

    w_ein = w_ein_ref[...]                     # (Hp, Hp)    in matmul dtype
    w_eout = w_eout_ref[...]
    w_ih_in = w_ih_in_ref[...]                 # (Hp, 3Hp)
    w_ih_out = w_ih_out_ref[...]
    w_hh = w_hh_ref[...]                       # (Hp, 3Hp)

    # Hoist bias broadcasts out of the statically unrolled step loop.
    b_ein = jnp.broadcast_to(b_ein_ref[...], (rows, Hp))
    b_eout = jnp.broadcast_to(b_eout_ref[...], (rows, Hp))
    b_iah = jnp.broadcast_to(b_iah_ref[...], (rows, Hp))
    b_oah = jnp.broadcast_to(b_oah_ref[...], (rows, Hp))
    b_ih = jnp.broadcast_to(b_ih_ref[...], (rows, 3 * Hp))
    b_hh = jnp.broadcast_to(b_hh_ref[...], (rows, 3 * Hp))

    for _ in range(step):                      # static unroll of gnn.step
        hq = h.astype(mm)
        # edge transforms on the tall slab -> MXU-friendly M = TB*N
        e_in = jnp.dot(hq, w_ein, preferred_element_type=jnp.float32) + b_ein
        e_out = jnp.dot(hq, w_eout, preferred_element_type=jnp.float32) + b_eout
        # per-session message passing over in/out adjacency (tiny K=N, keep f32)
        inp_in = jnp.einsum('bij,bjh->bih', a_in, e_in.reshape(TB, N, Hp),
                            preferred_element_type=jnp.float32
                            ).reshape(rows, Hp) + b_iah
        inp_out = jnp.einsum('bij,bjh->bih', a_out, e_out.reshape(TB, N, Hp),
                             preferred_element_type=jnp.float32
                             ).reshape(rows, Hp) + b_oah
        # GRU gates; concat along lanes replaced by two accumulated matmuls
        gi = (jnp.dot(inp_in.astype(mm), w_ih_in,
                      preferred_element_type=jnp.float32)
              + jnp.dot(inp_out.astype(mm), w_ih_out,
                        preferred_element_type=jnp.float32)
              + b_ih)                                              # (rows, 3Hp)
        gh = jnp.dot(hq, w_hh, preferred_element_type=jnp.float32) + b_hh
        # Hp == 128 -> slices at Hp / 2Hp are lane-tile aligned
        i_r, i_i, i_n = gi[:, :Hp], gi[:, Hp:2 * Hp], gi[:, 2 * Hp:]
        h_r, h_i, h_n = gh[:, :Hp], gh[:, Hp:2 * Hp], gh[:, 2 * Hp:]
        resetgate = jax.nn.sigmoid(i_r + h_r)
        inputgate = jax.nn.sigmoid(i_i + h_i)
        newgate = jnp.tanh(i_n + resetgate * h_n)
        h = newgate + inputgate * (h - newgate)

    out_ref[...] = h.reshape(TB, N, Hp)


def session_graph_forward(params, inputs, A, *, step, block_sessions=None,
                          matmul_dtype=jnp.float32):
    """SessionGraph.forward: hidden = gnn(A, embedding(inputs))."""
    emb = params["embedding"]
    H = emb.shape[1]
    hidden0 = emb[inputs].astype(jnp.float32)     # (B, N, H) -- gather in JAX glue
    B, N, _ = hidden0.shape
    Hp = _round_up(H, 128)

    # Sessions per block: target TB*N >= 256 rows (>=128 suffices on v5e),
    # capped by a rough per-block VMEM budget (~8 MiB of activations/temps).
    if block_sessions is None:
        tb = max(1, -(-256 // N))
        bytes_per_session = 4 * N * (2 * N + 2 * Hp + 12 * Hp)
        tb = max(1, min(tb, (8 << 20) // max(1, bytes_per_session)))
    else:
        tb = block_sessions
    tb = min(tb, B)
    num_blocks = pl.cdiv(B, tb)
    Bp = num_blocks * tb
    pad_b = Bp - B

    A = A.astype(jnp.float32)
    a_in = jnp.pad(A[:, :, :N], ((0, pad_b), (0, 0), (0, 0)))
    a_out = jnp.pad(A[:, :, N:2 * N], ((0, pad_b), (0, 0), (0, 0)))
    h0 = jnp.pad(hidden0, ((0, pad_b), (0, 0), (0, Hp - H)))

    # Weight prep: pre-transpose, zero-pad hidden dim to Hp, split w_ih so the
    # (N,2H) concat disappears, pad gate blocks so slices are aligned.
    mm = matmul_dtype
    w_ein = _pad2(params["w_edge_in"].T, Hp, Hp).astype(mm)
    b_ein = _pad_row(params["b_edge_in"], Hp)
    w_eout = _pad2(params["w_edge_out"].T, Hp, Hp).astype(mm)
    b_eout = _pad_row(params["b_edge_out"], Hp)
    b_iah = _pad_row(params["b_iah"], Hp)
    b_oah = _pad_row(params["b_oah"], Hp)
    w_ih = params["w_ih"]                                     # (3H, 2H)
    w_ih_in = _pad_gate_matrix(w_ih[:, :H].T, H, Hp).astype(mm)    # (Hp, 3Hp)
    w_ih_out = _pad_gate_matrix(w_ih[:, H:2 * H].T, H, Hp).astype(mm)
    b_ih = _pad_gate_bias(params["b_ih"], H, Hp)
    w_hh = _pad_gate_matrix(params["w_hh"].T, H, Hp).astype(mm)    # (Hp, 3Hp)
    b_hh = _pad_gate_bias(params["b_hh"], H, Hp)

    kernel = functools.partial(_gnn_kernel, step=step, hidden_pad=Hp,
                               matmul_dtype=matmul_dtype)

    batched = lambda i: (i, 0, 0)
    shared = lambda i: (0, 0)

    out = pl.pallas_call(
        kernel,
        out_shape=jax.ShapeDtypeStruct((Bp, N, Hp), jnp.float32),
        grid_spec=pltpu.PrefetchScalarGridSpec(
            num_scalar_prefetch=0,
            grid=(num_blocks,),
            in_specs=[
                pl.BlockSpec((tb, N, N), batched),        # A_in
                pl.BlockSpec((tb, N, N), batched),        # A_out
                pl.BlockSpec((tb, N, Hp), batched),       # hidden0 (padded)
                pl.BlockSpec((Hp, Hp), shared),           # w_ein (transposed)
                pl.BlockSpec((1, Hp), shared),            # b_ein
                pl.BlockSpec((Hp, Hp), shared),           # w_eout
                pl.BlockSpec((1, Hp), shared),            # b_eout
                pl.BlockSpec((1, Hp), shared),            # b_iah
                pl.BlockSpec((1, Hp), shared),            # b_oah
                pl.BlockSpec((Hp, 3 * Hp), shared),       # w_ih (input_in half)
                pl.BlockSpec((Hp, 3 * Hp), shared),       # w_ih (input_out half)
                pl.BlockSpec((1, 3 * Hp), shared),        # b_ih
                pl.BlockSpec((Hp, 3 * Hp), shared),       # w_hh (transposed)
                pl.BlockSpec((1, 3 * Hp), shared),        # b_hh
            ],
            out_specs=pl.BlockSpec((tb, N, Hp), batched),
        ),
        compiler_params=pltpu.CompilerParams(
            dimension_semantics=("parallel",)),
    )(a_in, a_out, h0,
      w_ein, b_ein, w_eout, b_eout, b_iah, b_oah,
      w_ih_in, w_ih_out, b_ih, w_hh, b_hh)

    return out[:B, :, :H]


def _reference_forward(params, inputs, A, *, step):
    """Pure-JAX reference that mirrors the PyTorch GNNCell exactly."""
    hidden = params["embedding"][inputs].astype(jnp.float32)
    N = hidden.shape[1]
    for _ in range(step):
        e_in = hidden @ params["w_edge_in"].T + params["b_edge_in"]
        e_out = hidden @ params["w_edge_out"].T + params["b_edge_out"]
        input_in = jnp.matmul(A[:, :, :N], e_in) + params["b_iah"]
        input_out = jnp.matmul(A[:, :, N:2 * N], e_out) + params["b_oah"]
        inputs_cat = jnp.concatenate([input_in, input_out], axis=2)
        gi = inputs_cat @ params["w_ih"].T + params["b_ih"]
        gh = hidden @ params["w_hh"].T + params["b_hh"]
        i_r, i_i, i_n = jnp.split(gi, 3, axis=2)
        h_r, h_i, h_n = jnp.split(gh, 3, axis=2)
        resetgate = jax.nn.sigmoid(i_r + h_r)
        inputgate = jax.nn.sigmoid(i_i + h_i)
        newgate = jnp.tanh(i_n + resetgate * h_n)
        hidden = newgate + inputgate * (hidden - newgate)
    return hidden


def _init_params(key, n_node, hidden_size):
    """Deterministic init mirroring reset_parameters(): Normal(0, 0.1)."""
    H = hidden_size
    names_shapes = [
        ("embedding", (n_node, H)),
        ("w_ih", (3 * H, 2 * H)),
        ("w_hh", (3 * H, H)),
        ("b_ih", (3 * H,)),
        ("b_hh", (3 * H,)),
        ("b_iah", (H,)),
        ("b_oah", (H,)),
        ("w_edge_in", (H, H)),
        ("b_edge_in", (H,)),
        ("w_edge_out", (H, H)),
        ("b_edge_out", (H,)),
    ]
    params = {}
    keys = jax.random.split(key, len(names_shapes))
    for k, (name, shape) in zip(keys, names_shapes):
        params[name] = 0.1 * jax.random.normal(k, shape, dtype=jnp.float32)
    return params
    # TODO(synk): compute_scores / loss / optimizer from SessionGraph are training
    # machinery outside forward(inputs, A) and are not implemented here.


if __name__ == "__main__":
    B, N, H = 2, 8, 32        # batch, unique-items-per-session, hidden size
    n_node = 20
    step = 2

    key = jax.random.PRNGKey(0)
    k_par, k_in, k_a = jax.random.split(key, 3)
    params = _init_params(k_par, n_node, H)

    inputs = jax.random.randint(k_in, (B, N), 0, n_node, dtype=jnp.int32)
    A = jax.random.uniform(k_a, (B, N, 2 * N), dtype=jnp.float32)

    ref = _reference_forward(params, inputs, A, step=step)

    # f32 matmuls: bit-faithful to the reference formulation.
    out = session_graph_forward(params, inputs, A, step=step)
    out = jax.block_until_ready(out)
    np.testing.assert_allclose(np.asarray(out), np.asarray(ref), rtol=1e-5, atol=1e-5)

    # bf16 matmul operands (v6e/v7x MXU path); gate/elementwise math stays f32.
    out_bf16 = session_graph_forward(params, inputs, A, step=step,
                                     matmul_dtype=jnp.bfloat16)
    out_bf16 = jax.block_until_ready(out_bf16)
    np.testing.assert_allclose(np.asarray(out_bf16), np.asarray(ref),
                               rtol=3e-2, atol=3e-2)

    print("KERNEL_OK")
</pallas_src>

<mosaic_0001>
module attributes {stable_mosaic.version = 11 : i64} {
  func.func @_gnn_kernel(%arg0: i32, %arg1: memref<2x8x8xf32, #tpu.memory_space<vmem>>, %arg2: memref<2x8x8xf32, #tpu.memory_space<vmem>>, %arg3: memref<2x8x128xf32, #tpu.memory_space<vmem>>, %arg4: memref<128x128xf32, #tpu.memory_space<vmem>>, %arg5: memref<1x128xf32, #tpu.memory_space<vmem>>, %arg6: memref<128x128xf32, #tpu.memory_space<vmem>>, %arg7: memref<1x128xf32, #tpu.memory_space<vmem>>, %arg8: memref<1x128xf32, #tpu.memory_space<vmem>>, %arg9: memref<1x128xf32, #tpu.memory_space<vmem>>, %arg10: memref<128x384xf32, #tpu.memory_space<vmem>>, %arg11: memref<128x384xf32, #tpu.memory_space<vmem>>, %arg12: memref<1x384xf32, #tpu.memory_space<vmem>>, %arg13: memref<128x384xf32, #tpu.memory_space<vmem>>, %arg14: memref<1x384xf32, #tpu.memory_space<vmem>>, %arg15: memref<2x8x128xf32, #tpu.memory_space<vmem>>) attributes {dimension_semantics = [#tpu.dimension_semantics<parallel>], iteration_bounds = array<i64: 1>, scalar_prefetch = 0 : i64, scratch_operands = 0 : i64, tpu.core_type = #tpu.core_type<tc>, window_params = [{transform_indices = @transform_0, window_bounds = array<i64: 2, 8, 8>}, {transform_indices = @transform_1, window_bounds = array<i64: 2, 8, 8>}, {transform_indices = @transform_2, window_bounds = array<i64: 2, 8, 128>}, {pipeline_mode = #tpu.pipeline_mode<synchronous>, transform_indices = @transform_3, window_bounds = array<i64: 128, 128>}, {pipeline_mode = #tpu.pipeline_mode<synchronous>, transform_indices = @transform_4, window_bounds = array<i64: 1, 128>}, {pipeline_mode = #tpu.pipeline_mode<synchronous>, transform_indices = @transform_5, window_bounds = array<i64: 128, 128>}, {pipeline_mode = #tpu.pipeline_mode<synchronous>, transform_indices = @transform_6, window_bounds = array<i64: 1, 128>}, {pipeline_mode = #tpu.pipeline_mode<synchronous>, transform_indices = @transform_7, window_bounds = array<i64: 1, 128>}, {pipeline_mode = #tpu.pipeline_mode<synchronous>, transform_indices = @transform_8, window_bounds = array<i64: 1, 128>}, {pipeline_mode = #tpu.pipeline_mode<synchronous>, transform_indices = @transform_9, window_bounds = array<i64: 128, 384>}, {pipeline_mode = #tpu.pipeline_mode<synchronous>, transform_indices = @transform_10, window_bounds = array<i64: 128, 384>}, {pipeline_mode = #tpu.pipeline_mode<synchronous>, transform_indices = @transform_11, window_bounds = array<i64: 1, 384>}, {pipeline_mode = #tpu.pipeline_mode<synchronous>, transform_indices = @transform_12, window_bounds = array<i64: 128, 384>}, {pipeline_mode = #tpu.pipeline_mode<synchronous>, transform_indices = @transform_13, window_bounds = array<i64: 1, 384>}, {transform_indices = @transform_14, window_bounds = array<i64: 2, 8, 128>}]} {
    %c0 = arith.constant 0 : index
    %c0_0 = arith.constant 0 : index
    %c0_1 = arith.constant 0 : index
    %0 = vector.load %arg1[%c0, %c0_0, %c0_1] : memref<2x8x8xf32, #tpu.memory_space<vmem>>, vector<2x8x8xf32>
    %c0_2 = arith.constant 0 : index
    %c0_3 = arith.constant 0 : index
    %c0_4 = arith.constant 0 : index
    %1 = vector.load %arg2[%c0_2, %c0_3, %c0_4] : memref<2x8x8xf32, #tpu.memory_space<vmem>>, vector<2x8x8xf32>
    %c0_5 = arith.constant 0 : index
    %c0_6 = arith.constant 0 : index
    %c0_7 = arith.constant 0 : index
    %2 = vector.load %arg3[%c0_5, %c0_6, %c0_7] : memref<2x8x128xf32, #tpu.memory_space<vmem>>, vector<2x8x128xf32>
    %3 = vector.shape_cast %2 : vector<2x8x128xf32> to vector<16x128xf32>
    %c0_8 = arith.constant 0 : index
    %c0_9 = arith.constant 0 : index
    %4 = vector.load %arg4[%c0_8, %c0_9] : memref<128x128xf32, #tpu.memory_space<vmem>>, vector<128x128xf32>
    %c0_10 = arith.constant 0 : index
    %c0_11 = arith.constant 0 : index
    %5 = vector.load %arg6[%c0_10, %c0_11] : memref<128x128xf32, #tpu.memory_space<vmem>>, vector<128x128xf32>
    %c0_12 = arith.constant 0 : index
    %c0_13 = arith.constant 0 : index
    %6 = vector.load %arg10[%c0_12, %c0_13] : memref<128x384xf32, #tpu.memory_space<vmem>>, vector<128x384xf32>
    %c0_14 = arith.constant 0 : index
    %c0_15 = arith.constant 0 : index
    %7 = vector.load %arg11[%c0_14, %c0_15] : memref<128x384xf32, #tpu.memory_space<vmem>>, vector<128x384xf32>
    %c0_16 = arith.constant 0 : index
    %c0_17 = arith.constant 0 : index
    %8 = vector.load %arg13[%c0_16, %c0_17] : memref<128x384xf32, #tpu.memory_space<vmem>>, vector<128x384xf32>
    %c0_18 = arith.constant 0 : index
    %c0_19 = arith.constant 0 : index
    %9 = vector.load %arg5[%c0_18, %c0_19] : memref<1x128xf32, #tpu.memory_space<vmem>>, vector<1x128xf32>
    %10 = vector.shape_cast %9 : vector<1x128xf32> to vector<1x128xf32>
    %11 = vector.broadcast %10 : vector<1x128xf32> to vector<16x128xf32>
    %c0_20 = arith.constant 0 : index
    %c0_21 = arith.constant 0 : index
    %12 = vector.load %arg7[%c0_20, %c0_21] : memref<1x128xf32, #tpu.memory_space<vmem>>, vector<1x128xf32>
    %13 = vector.shape_cast %12 : vector<1x128xf32> to vector<1x128xf32>
    %14 = vector.broadcast %13 : vector<1x128xf32> to vector<16x128xf32>
    %c0_22 = arith.constant 0 : index
    %c0_23 = arith.constant 0 : index
    %15 = vector.load %arg8[%c0_22, %c0_23] : memref<1x128xf32, #tpu.memory_space<vmem>>, vector<1x128xf32>
    %16 = vector.shape_cast %15 : vector<1x128xf32> to vector<1x128xf32>
    %17 = vector.broadcast %16 : vector<1x128xf32> to vector<16x128xf32>
    %c0_24 = arith.constant 0 : index
    %c0_25 = arith.constant 0 : index
    %18 = vector.load %arg9[%c0_24, %c0_25] : memref<1x128xf32, #tpu.memory_space<vmem>>, vector<1x128xf32>
    %19 = vector.shape_cast %18 : vector<1x128xf32> to vector<1x128xf32>
    %20 = vector.broadcast %19 : vector<1x128xf32> to vector<16x128xf32>
    %c0_26 = arith.constant 0 : index
    %c0_27 = arith.constant 0 : index
    %21 = vector.load %arg12[%c0_26, %c0_27] : memref<1x384xf32, #tpu.memory_space<vmem>>, vector<1x384xf32>
    %22 = vector.shape_cast %21 : vector<1x384xf32> to vector<1x384xf32>
    %23 = vector.broadcast %22 : vector<1x384xf32> to vector<16x384xf32>
    %c0_28 = arith.constant 0 : index
    %c0_29 = arith.constant 0 : index
    %24 = vector.load %arg14[%c0_28, %c0_29] : memref<1x384xf32, #tpu.memory_space<vmem>>, vector<1x384xf32>
    %25 = vector.shape_cast %24 : vector<1x384xf32> to vector<1x384xf32>
    %26 = vector.broadcast %25 : vector<1x384xf32> to vector<16x384xf32>
    %cst = arith.constant dense<0.000000e+00> : vector<16x128xf32>
    %27 = tpu.matmul %3, %4, %cst {dimension_numbers = #tpu.dot_dimension_numbers<[1], [0], [0], [1], [0, 0, 1, 1], [], []>} : vector<16x128xf32>, vector<128x128xf32>, vector<16x128xf32> -> vector<16x128xf32>
    %28 = arith.addf %27, %11 : vector<16x128xf32>
    %cst_30 = arith.constant dense<0.000000e+00> : vector<16x128xf32>
    %29 = tpu.matmul %3, %5, %cst_30 {dimension_numbers = #tpu.dot_dimension_numbers<[1], [0], [0], [1], [0, 0, 1, 1], [], []>} : vector<16x128xf32>, vector<128x128xf32>, vector<16x128xf32> -> vector<16x128xf32>
    %30 = arith.addf %29, %14 : vector<16x128xf32>
    %31 = vector.shape_cast %28 : vector<16x128xf32> to vector<2x8x128xf32>
    "tpu.trace_start"() <{level = 10 : i32, message = "bij,bjh->bih"}> : () -> ()
    %cst_31 = arith.constant dense<0.000000e+00> : vector<2x8x128xf32>
    %32 = tpu.matmul %0, %31, %cst_31 {dimension_numbers = #tpu.dot_dimension_numbers<[2], [1], [1], [2], [0, 0, 0, 1, 1, 2], [0], [0]>} : vector<2x8x8xf32>, vector<2x8x128xf32>, vector<2x8x128xf32> -> vector<2x8x128xf32>
    "tpu.trace_stop"() : () -> ()
    %33 = vector.shape_cast %32 : vector<2x8x128xf32> to vector<16x128xf32>
    %34 = arith.addf %33, %17 : vector<16x128xf32>
    %35 = vector.shape_cast %30 : vector<16x128xf32> to vector<2x8x128xf32>
    "tpu.trace_start"() <{level = 10 : i32, message = "bij,bjh->bih"}> : () -> ()
    %cst_32 = arith.constant dense<0.000000e+00> : vector<2x8x128xf32>
    %36 = tpu.matmul %1, %35, %cst_32 {dimension_numbers = #tpu.dot_dimension_numbers<[2], [1], [1], [2], [0, 0, 0, 1, 1, 2], [0], [0]>} : vector<2x8x8xf32>, vector<2x8x128xf32>, vector<2x8x128xf32> -> vector<2x8x128xf32>
    "tpu.trace_stop"() : () -> ()
    %37 = vector.shape_cast %36 : vector<2x8x128xf32> to vector<16x128xf32>
    %38 = arith.addf %37, %20 : vector<16x128xf32>
    %cst_33 = arith.constant dense<0.000000e+00> : vector<16x384xf32>
    %39 = tpu.matmul %34, %6, %cst_33 {dimension_numbers = #tpu.dot_dimension_numbers<[1], [0], [0], [1], [0, 0, 1, 1], [], []>} : vector<16x128xf32>, vector<128x384xf32>, vector<16x384xf32> -> vector<16x384xf32>
    %cst_34 = arith.constant dense<0.000000e+00> : vector<16x384xf32>
    %40 = tpu.matmul %38, %7, %cst_34 {dimension_numbers = #tpu.dot_dimension_numbers<[1], [0], [0], [1], [0, 0, 1, 1], [], []>} : vector<16x128xf32>, vector<128x384xf32>, vector<16x384xf32> -> vector<16x384xf32>
    %41 = arith.addf %39, %40 : vector<16x384xf32>
    %42 = arith.addf %41, %23 : vector<16x384xf32>
    %cst_35 = arith.constant dense<0.000000e+00> : vector<16x384xf32>
    %43 = tpu.matmul %3, %8, %cst_35 {dimension_numbers = #tpu.dot_dimension_numbers<[1], [0], [0], [1], [0, 0, 1, 1], [], []>} : vector<16x128xf32>, vector<128x384xf32>, vector<16x384xf32> -> vector<16x384xf32>
    %44 = arith.addf %43, %26 : vector<16x384xf32>
    %45 = vector.extract_strided_slice %42 {offsets = [0, 0], sizes = [16, 128], strides = [1, 1]} : vector<16x384xf32> to vector<16x128xf32>
    %46 = vector.extract_strided_slice %42 {offsets = [0, 128], sizes = [16, 128], strides = [1, 1]} : vector<16x384xf32> to vector<16x128xf32>
    %47 = vector.extract_strided_slice %42 {offsets = [0, 256], sizes = [16, 128], strides = [1, 1]} : vector<16x384xf32> to vector<16x128xf32>
    %48 = vector.extract_strided_slice %44 {offsets = [0, 0], sizes = [16, 128], strides = [1, 1]} : vector<16x384xf32> to vector<16x128xf32>
    %49 = vector.extract_strided_slice %44 {offsets = [0, 128], sizes = [16, 128], strides = [1, 1]} : vector<16x384xf32> to vector<16x128xf32>
    %50 = vector.extract_strided_slice %44 {offsets = [0, 256], sizes = [16, 128], strides = [1, 1]} : vector<16x384xf32> to vector<16x128xf32>
    %51 = arith.addf %45, %48 : vector<16x128xf32>
    %52 = arith.negf %51 : vector<16x128xf32>
    %53 = math.exp %52 : vector<16x128xf32>
    %cst_36 = arith.constant 1.000000e+00 : f32
    %54 = vector.broadcast %cst_36 : f32 to vector<16x128xf32>
    %55 = arith.addf %54, %53 : vector<16x128xf32>
    %56 = arith.divf %54, %55 : vector<16x128xf32>
    %57 = arith.addf %46, %49 : vector<16x128xf32>
    %58 = arith.negf %57 : vector<16x128xf32>
    %59 = math.exp %58 : vector<16x128xf32>
    %cst_37 = arith.constant 1.000000e+00 : f32
    %60 = vector.broadcast %cst_37 : f32 to vector<16x128xf32>
    %61 = arith.addf %60, %59 : vector<16x128xf32>
    %62 = arith.divf %60, %61 : vector<16x128xf32>
    %63 = arith.mulf %56, %50 : vector<16x128xf32>
    %64 = arith.addf %47, %63 : vector<16x128xf32>
    %65 = math.tanh %64 : vector<16x128xf32>
    %66 = arith.subf %3, %65 : vector<16x128xf32>
    %67 = arith.mulf %62, %66 : vector<16x128xf32>
    %68 = arith.addf %65, %67 : vector<16x128xf32>
    %cst_38 = arith.constant dense<0.000000e+00> : vector<16x128xf32>
    %69 = tpu.matmul %68, %4, %cst_38 {dimension_numbers = #tpu.dot_dimension_numbers<[1], [0], [0], [1], [0, 0, 1, 1], [], []>} : vector<16x128xf32>, vector<128x128xf32>, vector<16x128xf32> -> vector<16x128xf32>
    %70 = arith.addf %69, %11 : vector<16x128xf32>
    %cst_39 = arith.constant dense<0.000000e+00> : vector<16x128xf32>
    %71 = tpu.matmul %68, %5, %cst_39 {dimension_numbers = #tpu.dot_dimension_numbers<[1], [0], [0], [1], [0, 0, 1, 1], [], []>} : vector<16x128xf32>, vector<128x128xf32>, vector<16x128xf32> -> vector<16x128xf32>
    %72 = arith.addf %71, %14 : vector<16x128xf32>
    %73 = vector.shape_cast %70 : vector<16x128xf32> to vector<2x8x128xf32>
    "tpu.trace_start"() <{level = 10 : i32, message = "bij,bjh->bih"}> : () -> ()
    %cst_40 = arith.constant dense<0.000000e+00> : vector<2x8x128xf32>
    %74 = tpu.matmul %0, %73, %cst_40 {dimension_numbers = #tpu.dot_dimension_numbers<[2], [1], [1], [2], [0, 0, 0, 1, 1, 2], [0], [0]>} : vector<2x8x8xf32>, vector<2x8x128xf32>, vector<2x8x128xf32> -> vector<2x8x128xf32>
    "tpu.trace_stop"() : () -> ()
    %75 = vector.shape_cast %74 : vector<2x8x128xf32> to vector<16x128xf32>
    %76 = arith.addf %75, %17 : vector<16x128xf32>
    %77 = vector.shape_cast %72 : vector<16x128xf32> to vector<2x8x128xf32>
    "tpu.trace_start"() <{level = 10 : i32, message = "bij,bjh->bih"}> : () -> ()
    %cst_41 = arith.constant dense<0.000000e+00> : vector<2x8x128xf32>
    %78 = tpu.matmul %1, %77, %cst_41 {dimension_numbers = #tpu.dot_dimension_numbers<[2], [1], [1], [2], [0, 0, 0, 1, 1, 2], [0], [0]>} : vector<2x8x8xf32>, vector<2x8x128xf32>, vector<2x8x128xf32> -> vector<2x8x128xf32>
    "tpu.trace_stop"() : () -> ()
    %79 = vector.shape_cast %78 : vector<2x8x128xf32> to vector<16x128xf32>
    %80 = arith.addf %79, %20 : vector<16x128xf32>
    %cst_42 = arith.constant dense<0.000000e+00> : vector<16x384xf32>
    %81 = tpu.matmul %76, %6, %cst_42 {dimension_numbers = #tpu.dot_dimension_numbers<[1], [0], [0], [1], [0, 0, 1, 1], [], []>} : vector<16x128xf32>, vector<128x384xf32>, vector<16x384xf32> -> vector<16x384xf32>
    %cst_43 = arith.constant dense<0.000000e+00> : vector<16x384xf32>
    %82 = tpu.matmul %80, %7, %cst_43 {dimension_numbers = #tpu.dot_dimension_numbers<[1], [0], [0], [1], [0, 0, 1, 1], [], []>} : vector<16x128xf32>, vector<128x384xf32>, vector<16x384xf32> -> vector<16x384xf32>
    %83 = arith.addf %81, %82 : vector<16x384xf32>
    %84 = arith.addf %83, %23 : vector<16x384xf32>
    %cst_44 = arith.constant dense<0.000000e+00> : vector<16x384xf32>
    %85 = tpu.matmul %68, %8, %cst_44 {dimension_numbers = #tpu.dot_dimension_numbers<[1], [0], [0], [1], [0, 0, 1, 1], [], []>} : vector<16x128xf32>, vector<128x384xf32>, vector<16x384xf32> -> vector<16x384xf32>
    %86 = arith.addf %85, %26 : vector<16x384xf32>
    %87 = vector.extract_strided_slice %84 {offsets = [0, 0], sizes = [16, 128], strides = [1, 1]} : vector<16x384xf32> to vector<16x128xf32>
    %88 = vector.extract_strided_slice %84 {offsets = [0, 128], sizes = [16, 128], strides = [1, 1]} : vector<16x384xf32> to vector<16x128xf32>
    %89 = vector.extract_strided_slice %84 {offsets = [0, 256], sizes = [16, 128], strides = [1, 1]} : vector<16x384xf32> to vector<16x128xf32>
    %90 = vector.extract_strided_slice %86 {offsets = [0, 0], sizes = [16, 128], strides = [1, 1]} : vector<16x384xf32> to vector<16x128xf32>
    %91 = vector.extract_strided_slice %86 {offsets = [0, 128], sizes = [16, 128], strides = [1, 1]} : vector<16x384xf32> to vector<16x128xf32>
    %92 = vector.extract_strided_slice %86 {offsets = [0, 256], sizes = [16, 128], strides = [1, 1]} : vector<16x384xf32> to vector<16x128xf32>
    %93 = arith.addf %87, %90 : vector<16x128xf32>
    %94 = arith.negf %93 : vector<16x128xf32>
    %95 = math.exp %94 : vector<16x128xf32>
    %cst_45 = arith.constant 1.000000e+00 : f32
    %96 = vector.broadcast %cst_45 : f32 to vector<16x128xf32>
    %97 = arith.addf %96, %95 : vector<16x128xf32>
    %98 = arith.divf %96, %97 : vector<16x128xf32>
    %99 = arith.addf %88, %91 : vector<16x128xf32>
    %100 = arith.negf %99 : vector<16x128xf32>
    %101 = math.exp %100 : vector<16x128xf32>
    %cst_46 = arith.constant 1.000000e+00 : f32
    %102 = vector.broadcast %cst_46 : f32 to vector<16x128xf32>
    %103 = arith.addf %102, %101 : vector<16x128xf32>
    %104 = arith.divf %102, %103 : vector<16x128xf32>
    %105 = arith.mulf %98, %92 : vector<16x128xf32>
    %106 = arith.addf %89, %105 : vector<16x128xf32>
    %107 = math.tanh %106 : vector<16x128xf32>
    %108 = arith.subf %68, %107 : vector<16x128xf32>
    %109 = arith.mulf %104, %108 : vector<16x128xf32>
    %110 = arith.addf %107, %109 : vector<16x128xf32>
    %111 = vector.shape_cast %110 : vector<16x128xf32> to vector<2x8x128xf32>
    %c0_47 = arith.constant 0 : index
    %c0_48 = arith.constant 0 : index
    %c0_49 = arith.constant 0 : index
    %112 = vector.load %arg15[%c0_47, %c0_48, %c0_49] : memref<2x8x128xf32, #tpu.memory_space<vmem>>, vector<2x8x128xf32>
    tpu.vector_store %arg15[%c0_47, %c0_48, %c0_49], %111 {strides = array<i32>} : memref<2x8x128xf32, #tpu.memory_space<vmem>>, vector<2x8x128xf32>,
    return
  }
  func.func @transform_0(%arg0: i32) -> (i32, i32, i32) {
    %c0_i32 = arith.constant 0 : i32
    %c0_i32_0 = arith.constant 0 : i32
    %c0_i32_1 = arith.constant 0 : i32
    return %arg0, %c0_i32, %c0_i32_0 : i32, i32, i32
  }
  func.func @transform_1(%arg0: i32) -> (i32, i32, i32) {
    %c0_i32 = arith.constant 0 : i32
    %c0_i32_0 = arith.constant 0 : i32
    %c0_i32_1 = arith.constant 0 : i32
    return %arg0, %c0_i32, %c0_i32_0 : i32, i32, i32
  }
  func.func @transform_2(%arg0: i32) -> (i32, i32, i32) {
    %c0_i32 = arith.constant 0 : i32
    %c0_i32_0 = arith.constant 0 : i32
    %c0_i32_1 = arith.constant 0 : i32
    return %arg0, %c0_i32, %c0_i32_0 : i32, i32, i32
  }
  func.func @transform_3(%arg0: i32) -> (i32, i32) {
    %c0_i32 = arith.constant 0 : i32
    %c0_i32_0 = arith.constant 0 : i32
    %c0_i32_1 = arith.constant 0 : i32
    return %c0_i32, %c0_i32_0 : i32, i32
  }
  func.func @transform_4(%arg0: i32) -> (i32, i32) {
    %c0_i32 = arith.constant 0 : i32
    %c0_i32_0 = arith.constant 0 : i32
    %c0_i32_1 = arith.constant 0 : i32
    return %c0_i32, %c0_i32_0 : i32, i32
  }
  func.func @transform_5(%arg0: i32) -> (i32, i32) {
    %c0_i32 = arith.constant 0 : i32
    %c0_i32_0 = arith.constant 0 : i32
    %c0_i32_1 = arith.constant 0 : i32
    return %c0_i32, %c0_i32_0 : i32, i32
  }
  func.func @transform_6(%arg0: i32) -> (i32, i32) {
    %c0_i32 = arith.constant 0 : i32
    %c0_i32_0 = arith.constant 0 : i32
    %c0_i32_1 = arith.constant 0 : i32
    return %c0_i32, %c0_i32_0 : i32, i32
  }
  func.func @transform_7(%arg0: i32) -> (i32, i32) {
    %c0_i32 = arith.constant 0 : i32
    %c0_i32_0 = arith.constant 0 : i32
    %c0_i32_1 = arith.constant 0 : i32
    return %c0_i32, %c0_i32_0 : i32, i32
  }
  func.func @transform_8(%arg0: i32) -> (i32, i32) {
    %c0_i32 = arith.constant 0 : i32
    %c0_i32_0 = arith.constant 0 : i32
    %c0_i32_1 = arith.constant 0 : i32
    return %c0_i32, %c0_i32_0 : i32, i32
  }
  func.func @transform_9(%arg0: i32) -> (i32, i32) {
    %c0_i32 = arith.constant 0 : i32
    %c0_i32_0 = arith.constant 0 : i32
    %c0_i32_1 = arith.constant 0 : i32
    return %c0_i32, %c0_i32_0 : i32, i32
  }
  func.func @transform_10(%arg0: i32) -> (i32, i32) {
    %c0_i32 = arith.constant 0 : i32
    %c0_i32_0 = arith.constant 0 : i32
    %c0_i32_1 = arith.constant 0 : i32
    return %c0_i32, %c0_i32_0 : i32, i32
  }
  func.func @transform_11(%arg0: i32) -> (i32, i32) {
    %c0_i32 = arith.constant 0 : i32
    %c0_i32_0 = arith.constant 0 : i32
    %c0_i32_1 = arith.constant 0 : i32
    return %c0_i32, %c0_i32_0 : i32, i32
  }
  func.func @transform_12(%arg0: i32) -> (i32, i32) {
    %c0_i32 = arith.constant 0 : i32
    %c0_i32_0 = arith.constant 0 : i32
    %c0_i32_1 = arith.constant 0 : i32
    return %c0_i32, %c0_i32_0 : i32, i32
  }
  func.func @transform_13(%arg0: i32) -> (i32, i32) {
    %c0_i32 = arith.constant 0 : i32
    %c0_i32_0 = arith.constant 0 : i32
    %c0_i32_1 = arith.constant 0 : i32
    return %c0_i32, %c0_i32_0 : i32, i32
  }
  func.func @transform_14(%arg0: i32) -> (i32, i32, i32) {
    %c0_i32 = arith.constant 0 : i32
    %c0_i32_0 = arith.constant 0 : i32
    %c0_i32_1 = arith.constant 0 : i32
    return %arg0, %c0_i32, %c0_i32_0 : i32, i32, i32
  }
}

</mosaic_0001>

<llo_original>
// kernel: tpu_custom_call.1
$region0: #{tpu_custom_call.1}
  #allocation0 [shape = 'u32[]', space=smem, size = 0x4, offset = 0x4, fixed_abs, tag = 'smem constant byte address 0x4 - core index']
  #allocation1 [shape = 'u32[72,128]{1,0:T(1,128)}', space=vmem, size = 0x9000, scoped, tag = 'internal scratch']
  %s0 = inlined_call_operand.hbm [shape: f32[2,8,8], index: 0, kind: input, shape index: {}]
  %s1 = inlined_call_operand.hbm [shape: f32[2,8,8], index: 1, kind: input, shape index: {}]
  %s2 = inlined_call_operand.hbm [shape: f32[2,8,128], index: 2, kind: input, shape index: {}]
  %s3 = inlined_call_operand.hbm [shape: f32[128,128], index: 3, kind: input, shape index: {}]
  %s4 = inlined_call_operand.hbm [shape: f32[1,128], index: 4, kind: input, shape index: {}]
  %s5 = inlined_call_operand.hbm [shape: f32[128,128], index: 5, kind: input, shape index: {}]
  %s6 = inlined_call_operand.hbm [shape: f32[1,128], index: 6, kind: input, shape index: {}]
  %s7 = inlined_call_operand.hbm [shape: f32[1,128], index: 7, kind: input, shape index: {}]
  %s8 = inlined_call_operand.vmem [shape: f32[1,128], index: 8, kind: input, shape index: {}]
  %s9 = inlined_call_operand.hbm [shape: f32[128,384], index: 9, kind: input, shape index: {}]
  %s10 = inlined_call_operand.hbm [shape: f32[128,384], index: 10, kind: input, shape index: {}]
  %s11 = inlined_call_operand.vmem [shape: f32[1,384], index: 11, kind: input, shape index: {}]
  %s12 = inlined_call_operand.hbm [shape: f32[128,384], index: 12, kind: input, shape index: {}]
  %s13 = inlined_call_operand.vmem [shape: f32[1,384], index: 13, kind: input, shape index: {}]
  %s14 = inlined_call_operand.hbm [shape: f32[2,8,128], index: 14, kind: output, shape index: {}]
  %s15 = sld [smem:[#allocation0]]
  $region110: #{tpu_custom_call.1} parent=0
    _
  %s17 = ssub.s32 1, %s15
  %s18 = scalar_select 0, %s17, %s15
  $region1: #{tpu_custom_call.1} parent=0
    #allocation2 [shape = 'u8[8192]{0}', space=vmem, size = 0x2000, scoped, tag = 'input window, operand 0, single buffered']
    #allocation3 [shape = 's32[1]{0}', space=sflag, size = 0x4, scoped, tag = 'scoped memory for tpu_custom_call.1']
    #allocation4 [shape = 's32[1]{0}', space=sflag, size = 0x4, scoped, tag = 'scoped memory for tpu_custom_call.1']
    #allocation5 [shape = 'u8[8192]{0}', space=vmem, size = 0x2000, scoped, tag = 'input window, operand 1, single buffered']
    #allocation6 [shape = 's32[1]{0}', space=sflag, size = 0x4, scoped, tag = 'scoped memory for tpu_custom_call.1']
    #allocation7 [shape = 'u8[8192]{0}', space=vmem, size = 0x2000, scoped, tag = 'input window, operand 2, single buffered']
    #allocation8 [shape = 'u8[65536]{0}', space=vmem, size = 0x10000, scoped, tag = 'input window, operand 3, single buffered']
    #allocation9 [shape = 's32[1]{0}', space=sflag, size = 0x4, scoped, tag = 'scoped memory for tpu_custom_call.1']
    #allocation10 [shape = 'u8[512]{0}', space=vmem, size = 0x400, scoped, tag = 'input window, operand 4, single buffered']
    #allocation11 [shape = 'u8[65536]{0}', space=vmem, size = 0x10000, scoped, tag = 'input window, operand 5, single buffered']
    #allocation12 [shape = 's32[1]{0}', space=sflag, size = 0x4, scoped, tag = 'scoped memory for tpu_custom_call.1']
    #allocation13 [shape = 'u8[512]{0}', space=vmem, size = 0x400, scoped, tag = 'input window, operand 6, single buffered']
    #allocation14 [shape = 'u8[512]{0}', space=vmem, size = 0x400, scoped, tag = 'input window, operand 7, single buffered']
    #allocation15 [shape = 's32[1]{0}', space=sflag, size = 0x4, scoped, tag = 'scoped memory for tpu_custom_call.1']
    #allocation16 [shape = 'u8[196608]{0}', space=vmem, size = 0x30000, scoped, tag = 'input window, operand 9, single buffered']
    #allocation17 [shape = 'u8[196608]{0}', space=vmem, size = 0x30000, scoped, tag = 'input window, operand 10, single buffered']
    #allocation18 [shape = 's32[1]{0}', space=sflag, size = 0x4, scoped, tag = 'scoped memory for tpu_custom_call.1']
    #allocation19 [shape = 'u8[196608]{0}', space=vmem, size = 0x30000, scoped, tag = 'input window, operand 12, single buffered']
    #allocation20 [shape = 'u8[8192]{0}', space=vmem, size = 0x2000, scoped, tag = 'output window, operand 0, single buffered']
    %19 = vsyncpa [#allocation3], 0
    %20 = vsyncpa [#allocation6], 0
    %21 = vsyncpa [#allocation9], 0
    %22 = vsyncpa [#allocation12], 0
    %23 = vsyncpa [#allocation15], 0
    %24 = vsyncpa [#allocation18], 0
    %25 = vsyncpa [#allocation4], 0
    // Predicated region
    $region2: #{tpu_custom_call.1} parent=1 // pred_check
      _
    $region3: #{tpu_custom_call.1} parent=1 // pred_check_branch
      %27 = sbr.rel (0) target = $region5
    $region4: #{tpu_custom_call.1} parent=1 // pred_region
      %29 = vsyncadd [#allocation3], 0
      %s30 = sshll.u32 %s0, 4
      %s31 = int_to_ptr.hbm [resolvable:$true] %s30
      %s32 = sshll.u32 [#allocation2], 4
      %s33 = int_to_ptr.vmem [resolvable:$true] %s32
      %38 = dma.hbm_to_vmem [thread:$0]  %s31, 256, %s33, [#allocation3], 128, 128, 8
    $region5: #{tpu_custom_call.1} parent=1 // pred_fallthru
      _
    // Predicated region
    $region6: #{tpu_custom_call.1} parent=1 // pred_check
      _
    $region7: #{tpu_custom_call.1} parent=1 // pred_check_branch
      %40 = sbr.rel (0) target = $region9
    $region8: #{tpu_custom_call.1} parent=1 // pred_region
      %42 = vsyncadd [#allocation6], 0
      %s43 = sshll.u32 %s1, 4
      %s44 = int_to_ptr.hbm [resolvable:$true] %s43
      %s45 = sshll.u32 [#allocation5], 4
      %s46 = int_to_ptr.vmem [resolvable:$true] %s45
      %51 = dma.hbm_to_vmem [thread:$0]  %s44, 256, %s46, [#allocation6], 128, 128, 8
    $region9: #{tpu_custom_call.1} parent=1 // pred_fallthru
      _
    // Predicated region
    $region10: #{tpu_custom_call.1} parent=1 // pred_check
      _
    $region11: #{tpu_custom_call.1} parent=1 // pred_check_branch
      %53 = sbr.rel (0) target = $region13
    $region12: #{tpu_custom_call.1} parent=1 // pred_region
      %55 = vsyncadd [#allocation6], 0
      %s56 = sshll.u32 %s2, 4
      %s57 = int_to_ptr.hbm [resolvable:$true] %s56
      %s58 = sshll.u32 [#allocation7], 4
      %s59 = int_to_ptr.vmem [resolvable:$true] %s58
      %64 = dma.hbm_to_vmem [thread:$0]  %s57, 256, %s59, [#allocation6], 128, 128, 8
    $region13: #{tpu_custom_call.1} parent=1 // pred_fallthru
      _
    // Predicated region
    $region14: #{tpu_custom_call.1} parent=1 // pred_check
      _
    $region15: #{tpu_custom_call.1} parent=1 // pred_check_branch
      %66 = sbr.rel (0) target = $region17
    $region16: #{tpu_custom_call.1} parent=1 // pred_region
      %68 = vsyncadd [#allocation9], 0
      %s69 = sshll.u32 %s3, 4
      %s70 = int_to_ptr.hbm [resolvable:$true] %s69
      %s71 = sshll.u32 [#allocation8], 4
      %s72 = int_to_ptr.vmem [resolvable:$true] %s71
      %77 = dma.hbm_to_vmem [thread:$0]  %s70, 2048, %s72, [#allocation9], 128, 128, 8
    $region17: #{tpu_custom_call.1} parent=1 // pred_fallthru
      _
    // Predicated region
    $region18: #{tpu_custom_call.1} parent=1 // pred_check
      _
    $region19: #{tpu_custom_call.1} parent=1 // pred_check_branch
      %79 = sbr.rel (0) target = $region21
    $region20: #{tpu_custom_call.1} parent=1 // pred_region
      %81 = vsyncadd [#allocation9], 0
      %s83 = sshll.u32 %s4, 4
      %s84 = int_to_ptr.hbm [resolvable:$true] %s83
      %s85 = sshll.u32 [#allocation10], 4
      %s86 = int_to_ptr.vmem [resolvable:$true] %s85
      %88 = dma.hbm_to_vmem [thread:$0]  %s84, 16, %s86, [#allocation9]
    $region21: #{tpu_custom_call.1} parent=1 // pred_fallthru
      _
    // Predicated region
    $region22: #{tpu_custom_call.1} parent=1 // pred_check
      _
    $region23: #{tpu_custom_call.1} parent=1 // pred_check_branch
      %90 = sbr.rel (0) target = $region25
    $region24: #{tpu_custom_call.1} parent=1 // pred_region
      %92 = vsyncadd [#allocation12], 0
      %s93 = sshll.u32 %s5, 4
      %s94 = int_to_ptr.hbm [resolvable:$true] %s93
      %s95 = sshll.u32 [#allocation11], 4
      %s96 = int_to_ptr.vmem [resolvable:$true] %s95
      %101 = dma.hbm_to_vmem [thread:$0]  %s94, 2048, %s96, [#allocation12], 128, 128, 8
    $region25: #{tpu_custom_call.1} parent=1 // pred_fallthru
      _
    // Predicated region
    $region26: #{tpu_custom_call.1} parent=1 // pred_check
      _
    $region27: #{tpu_custom_call.1} parent=1 // pred_check_branch
      %103 = sbr.rel (0) target = $region29
    $region28: #{tpu_custom_call.1} parent=1 // pred_region
      %105 = vsyncadd [#allocation12], 0
      %s107 = sshll.u32 %s6, 4
      %s108 = int_to_ptr.hbm [resolvable:$true] %s107
      %s109 = sshll.u32 [#allocation13], 4
      %s110 = int_to_ptr.vmem [resolvable:$true] %s109
      %112 = dma.hbm_to_vmem [thread:$0]  %s108, 16, %s110, [#allocation12]
    $region29: #{tpu_custom_call.1} parent=1 // pred_fallthru
      _
    // Predicated region
    $region30: #{tpu_custom_call.1} parent=1 // pred_check
      _
    $region31: #{tpu_custom_call.1} parent=1 // pred_check_branch
      %114 = sbr.rel (0) target = $region33
    $region32: #{tpu_custom_call.1} parent=1 // pred_region
      %116 = vsyncadd [#allocation15], 0
      %s118 = sshll.u32 %s7, 4
      %s119 = int_to_ptr.hbm [resolvable:$true] %s118
      %s120 = sshll.u32 [#allocation14], 4
      %s121 = int_to_ptr.vmem [resolvable:$true] %s120
      %123 = dma.hbm_to_vmem [thread:$0]  %s119, 16, %s121, [#allocation15]
    $region33: #{tpu_custom_call.1} parent=1 // pred_fallthru
      _
    // Predicated region
    $region34: #{tpu_custom_call.1} parent=1 // pred_check
      _
    $region35: #{tpu_custom_call.1} parent=1 // pred_check_branch
      %125 = sbr.rel (0) target = $region37
    $region36: #{tpu_custom_call.1} parent=1 // pred_region
      _
    $region37: #{tpu_custom_call.1} parent=1 // pred_fallthru
      _
    // Predicated region
    $region38: #{tpu_custom_call.1} parent=1 // pred_check
      _
    $region39: #{tpu_custom_call.1} parent=1 // pred_check_branch
      %127 = sbr.rel (0) target = $region41
    $region40: #{tpu_custom_call.1} parent=1 // pred_region
      %129 = vsyncadd [#allocation15], 0
      %s130 = sshll.u32 %s9, 4
      %s131 = int_to_ptr.hbm [resolvable:$true] %s130
      %s132 = sshll.u32 [#allocation16], 4
      %s133 = int_to_ptr.vmem [resolvable:$true] %s132
      %138 = dma.hbm_to_vmem [thread:$0]  %s131, 6144, %s133, [#allocation15], 384, 384, 24
    $region41: #{tpu_custom_call.1} parent=1 // pred_fallthru
      _
    // Predicated region
    $region42: #{tpu_custom_call.1} parent=1 // pred_check
      _
    $region43: #{tpu_custom_call.1} parent=1 // pred_check_branch
      %140 = sbr.rel (0) target = $region45
    $region44: #{tpu_custom_call.1} parent=1 // pred_region
      %142 = vsyncadd [#allocation18], 0
      %s143 = sshll.u32 %s10, 4
      %s144 = int_to_ptr.hbm [resolvable:$true] %s143
      %s145 = sshll.u32 [#allocation17], 4
      %s146 = int_to_ptr.vmem [resolvable:$true] %s145
      %151 = dma.hbm_to_vmem [thread:$0]  %s144, 6144, %s146, [#allocation18], 384, 384, 24
    $region45: #{tpu_custom_call.1} parent=1 // pred_fallthru
      _
    // Predicated region
    $region46: #{tpu_custom_call.1} parent=1 // pred_check
      _
    $region47: #{tpu_custom_call.1} parent=1 // pred_check_branch
      %153 = sbr.rel (0) target = $region49
    $region48: #{tpu_custom_call.1} parent=1 // pred_region
      _
    $region49: #{tpu_custom_call.1} parent=1 // pred_fallthru
      _
    // Predicated region
    $region50: #{tpu_custom_call.1} parent=1 // pred_check
      _
    $region51: #{tpu_custom_call.1} parent=1 // pred_check_branch
      %155 = sbr.rel (0) target = $region53
    $region52: #{tpu_custom_call.1} parent=1 // pred_region
      %157 = vsyncadd [#allocation18], 0
      %s158 = sshll.u32 %s12, 4
      %s159 = int_to_ptr.hbm [resolvable:$true] %s158
      %s160 = sshll.u32 [#allocation19], 4
      %s161 = int_to_ptr.vmem [resolvable:$true] %s160
      %166 = dma.hbm_to_vmem [thread:$0]  %s159, 6144, %s161, [#allocation18], 384, 384, 24
    $region53: #{tpu_custom_call.1} parent=1 // pred_fallthru
      _
    // Predicated region
    $region54: #{tpu_custom_call.1} parent=1 // pred_check
      _
    $region55: #{tpu_custom_call.1} parent=1 // pred_check_branch
      %168 = sbr.rel (0) target = $region57
    $region56: #{tpu_custom_call.1} parent=1 // pred_region
      _
    $region57: #{tpu_custom_call.1} parent=1 // pred_fallthru
      _
    // Predicated region
    $region58: #{tpu_custom_call.1} parent=1 // pred_check
      _
    $region59: #{tpu_custom_call.1} parent=1 // pred_check_branch
      %170 = sbr.rel (0) target = $region61
    $region60: #{tpu_custom_call.1} parent=1 // pred_region
      %172 = dma.done [#allocation3], 256
    $region61: #{tpu_custom_call.1} parent=1 // pred_fallthru
      _
    // Predicated region
    $region62: #{tpu_custom_call.1} parent=1 // pred_check
      _
    $region63: #{tpu_custom_call.1} parent=1 // pred_check_branch
      %174 = sbr.rel (0) target = $region65
    $region64: #{tpu_custom_call.1} parent=1 // pred_region
      %176 = dma.done [#allocation6], 256
    $region65: #{tpu_custom_call.1} parent=1 // pred_fallthru
      _
    // Predicated region
    $region66: #{tpu_custom_call.1} parent=1 // pred_check
      _
    $region67: #{tpu_custom_call.1} parent=1 // pred_check_branch
      %178 = sbr.rel (0) target = $region69
    $region68: #{tpu_custom_call.1} parent=1 // pred_region
      %180 = dma.done [#allocation6], 256
    $region69: #{tpu_custom_call.1} parent=1 // pred_fallthru
      _
    // Predicated region
    $region70: #{tpu_custom_call.1} parent=1 // pred_check
      _
    $region71: #{tpu_custom_call.1} parent=1 // pred_check_branch
      %182 = sbr.rel (0) target = $region73
    $region72: #{tpu_custom_call.1} parent=1 // pred_region
      %184 = dma.done [#allocation9], 2048
    $region73: #{tpu_custom_call.1} parent=1 // pred_fallthru
      _
    // Predicated region
    $region74: #{tpu_custom_call.1} parent=1 // pred_check
      _
    $region75: #{tpu_custom_call.1} parent=1 // pred_check_branch
      %186 = sbr.rel (0) target = $region77
    $region76: #{tpu_custom_call.1} parent=1 // pred_region
      %188 = dma.done [#allocation9], 16
    $region77: #{tpu_custom_call.1} parent=1 // pred_fallthru
      _
    // Predicated region
    $region78: #{tpu_custom_call.1} parent=1 // pred_check
      _
    $region79: #{tpu_custom_call.1} parent=1 // pred_check_branch
      %190 = sbr.rel (0) target = $region81
    $region80: #{tpu_custom_call.1} parent=1 // pred_region
      %192 = dma.done [#allocation12], 2048
    $region81: #{tpu_custom_call.1} parent=1 // pred_fallthru
      _
    // Predicated region
    $region82: #{tpu_custom_call.1} parent=1 // pred_check
      _
    $region83: #{tpu_custom_call.1} parent=1 // pred_check_branch
      %194 = sbr.rel (0) target = $region85
    $region84: #{tpu_custom_call.1} parent=1 // pred_region
      %196 = dma.done [#allocation12], 16
    $region85: #{tpu_custom_call.1} parent=1 // pred_fallthru
      _
    // Predicated region
    $region86: #{tpu_custom_call.1} parent=1 // pred_check
      _
    $region87: #{tpu_custom_call.1} parent=1 // pred_check_branch
      %198 = sbr.rel (0) target = $region89
    $region88: #{tpu_custom_call.1} parent=1 // pred_region
      %200 = dma.done [#allocation15], 16
    $region89: #{tpu_custom_call.1} parent=1 // pred_fallthru
      _
    // Predicated region
    $region90: #{tpu_custom_call.1} parent=1 // pred_check
      _
    $region91: #{tpu_custom_call.1} parent=1 // pred_check_branch
      %202 = sbr.rel (0) target = $region93
    $region92: #{tpu_custom_call.1} parent=1 // pred_region
      %204 = dma.done [#allocation15], 6144
    $region93: #{tpu_custom_call.1} parent=1 // pred_fallthru
      _
    // Predicated region
    $region94: #{tpu_custom_call.1} parent=1 // pred_check
      _
    $region95: #{tpu_custom_call.1} parent=1 // pred_check_branch
      %206 = sbr.rel (0) target = $region97
    $region96: #{tpu_custom_call.1} parent=1 // pred_region
      %208 = dma.done [#allocation18], 6144
    $region97: #{tpu_custom_call.1} parent=1 // pred_fallthru
      _
    // Predicated region
    $region98: #{tpu_custom_call.1} parent=1 // pred_check
      _
    $region99: #{tpu_custom_call.1} parent=1 // pred_check_branch
      %210 = sbr.rel (0) target = $region101
    $region100: #{tpu_custom_call.1} parent=1 // pred_region
      %212 = dma.done [#allocation18], 6144
    $region101: #{tpu_custom_call.1} parent=1 // pred_fallthru
      _
    %v213 = vld [vmem:[#allocation2] sm:$0xff]
    %v214 = vld [vmem:[#allocation2 + $0x8] sm:$0xff]
    %v215 = vld [vmem:[#allocation5] sm:$0xff]
    %v216 = vld [vmem:[#allocation5 + $0x8] sm:$0xff]
    %v217 = vld [vmem:[#allocation7] sm:$0xff]
    %v218 = vld [vmem:[#allocation7 + $0x8] sm:$0xff]
    %v219 = vld [vmem:[#allocation8] sm:$0xff]
    %v220 = vld [vmem:[#allocation8 + $0x8] sm:$0xff]
    %v221 = vld [vmem:[#allocation8 + $0x10] sm:$0xff]
    %v222 = vld [vmem:[#allocation8 + $0x18] sm:$0xff]
    %v223 = vld [vmem:[#allocation8 + $0x20] sm:$0xff]
    %v224 = vld [vmem:[#allocation8 + $0x28] sm:$0xff]
    %v225 = vld [vmem:[#allocation8 + $0x30] sm:$0xff]
    %v226 = vld [vmem:[#allocation8 + $0x38] sm:$0xff]
    %v227 = vld [vmem:[#allocation8 + $0x40] sm:$0xff]
    %v228 = vld [vmem:[#allocation8 + $0x48] sm:$0xff]
    %v229 = vld [vmem:[#allocation8 + $0x50] sm:$0xff]
    %v230 = vld [vmem:[#allocation8 + $0x58] sm:$0xff]
    %v231 = vld [vmem:[#allocation8 + $0x60] sm:$0xff]
    %v232 = vld [vmem:[#allocation8 + $0x68] sm:$0xff]
    %v233 = vld [vmem:[#allocation8 + $0x70] sm:$0xff]
    %v234 = vld [vmem:[#allocation8 + $0x78] sm:$0xff]
    %v235 = vld [vmem:[#allocation11] sm:$0xff]
    %v236 = vld [vmem:[#allocation11 + $0x8] sm:$0xff]
    %v237 = vld [vmem:[#allocation11 + $0x10] sm:$0xff]
    %v238 = vld [vmem:[#allocation11 + $0x18] sm:$0xff]
    %v239 = vld [vmem:[#allocation11 + $0x20] sm:$0xff]
    %v240 = vld [vmem:[#allocation11 + $0x28] sm:$0xff]
    %v241 = vld [vmem:[#allocation11 + $0x30] sm:$0xff]
    %v242 = vld [vmem:[#allocation11 + $0x38] sm:$0xff]
    %v243 = vld [vmem:[#allocation11 + $0x40] sm:$0xff]
    %v244 = vld [vmem:[#allocation11 + $0x48] sm:$0xff]
    %v245 = vld [vmem:[#allocation11 + $0x50] sm:$0xff]
    %v246 = vld [vmem:[#allocation11 + $0x58] sm:$0xff]
    %v247 = vld [vmem:[#allocation11 + $0x60] sm:$0xff]
    %v248 = vld [vmem:[#allocation11 + $0x68] sm:$0xff]
    %v249 = vld [vmem:[#allocation11 + $0x70] sm:$0xff]
    %v250 = vld [vmem:[#allocation11 + $0x78] sm:$0xff]
    %v251 = vld [vmem:[#allocation16] sm:$0xff]
    %v252 = vld [vmem:[#allocation16 + $0x8] sm:$0xff]
    %v253 = vld [vmem:[#allocation16 + $0x10] sm:$0xff]
    %v254 = vld [vmem:[#allocation16 + $0x18] sm:$0xff]
    %v255 = vld [vmem:[#allocation16 + $0x20] sm:$0xff]
    %v256 = vld [vmem:[#allocation16 + $0x28] sm:$0xff]
    %v257 = vld [vmem:[#allocation16 + $0x30] sm:$0xff]
    %v258 = vld [vmem:[#allocation16 + $0x38] sm:$0xff]
    %v259 = vld [vmem:[#allocation16 + $0x40] sm:$0xff]
    %v260 = vld [vmem:[#allocation16 + $0x48] sm:$0xff]
    %v261 = vld [vmem:[#allocation16 + $0x50] sm:$0xff]
    %v262 = vld [vmem:[#allocation16 + $0x58] sm:$0xff]
    %v263 = vld [vmem:[#allocation16 + $0x60] sm:$0xff]
    %v264 = vld [vmem:[#allocation16 + $0x68] sm:$0xff]
    %v265 = vld [vmem:[#allocation16 + $0x70] sm:$0xff]
    %v266 = vld [vmem:[#allocation16 + $0x78] sm:$0xff]
    %v267 = vld [vmem:[#allocation16 + $0x80] sm:$0xff]
    %v268 = vld [vmem:[#allocation16 + $0x88] sm:$0xff]
    %v269 = vld [vmem:[#allocation16 + $0x90] sm:$0xff]
    %v270 = vld [vmem:[#allocation16 + $0x98] sm:$0xff]
    %v271 = vld [vmem:[#allocation16 + $0xa0] sm:$0xff]
    %v272 = vld [vmem:[#allocation16 + $0xa8] sm:$0xff]
    %v273 = vld [vmem:[#allocation16 + $0xb0] sm:$0xff]
    %v274 = vld [vmem:[#allocation16 + $0xb8] sm:$0xff]
    %v275 = vld [vmem:[#allocation16 + $0xc0] sm:$0xff]
    %v276 = vld [vmem:[#allocation16 + $0xc8] sm:$0xff]
    %v277 = vld [vmem:[#allocation16 + $0xd0] sm:$0xff]
    %v278 = vld [vmem:[#allocation16 + $0xd8] sm:$0xff]
    %v279 = vld [vmem:[#allocation16 + $0xe0] sm:$0xff]
    %v280 = vld [vmem:[#allocation16 + $0xe8] sm:$0xff]
    %v281 = vld [vmem:[#allocation16 + $0xf0] sm:$0xff]
    %v282 = vld [vmem:[#allocation16 + $0xf8] sm:$0xff]
    %v283 = vld [vmem:[#allocation16 + $0x100] sm:$0xff]
    %v284 = vld [vmem:[#allocation16 + $0x108] sm:$0xff]
    %v285 = vld [vmem:[#allocation16 + $0x110] sm:$0xff]
    %v286 = vld [vmem:[#allocation16 + $0x118] sm:$0xff]
    %v287 = vld [vmem:[#allocation16 + $0x120] sm:$0xff]
    %v288 = vld [vmem:[#allocation16 + $0x128] sm:$0xff]
    %v289 = vld [vmem:[#allocation16 + $0x130] sm:$0xff]
    %v290 = vld [vmem:[#allocation16 + $0x138] sm:$0xff]
    %v291 = vld [vmem:[#allocation16 + $0x140] sm:$0xff]
    %v292 = vld [vmem:[#allocation16 + $0x148] sm:$0xff]
    %v293 = vld [vmem:[#allocation16 + $0x150] sm:$0xff]
    %v294 = vld [vmem:[#allocation16 + $0x158] sm:$0xff]
    %v295 = vld [vmem:[#allocation16 + $0x160] sm:$0xff]
    %v296 = vld [vmem:[#allocation16 + $0x168] sm:$0xff]
    %v297 = vld [vmem:[#allocation16 + $0x170] sm:$0xff]
    %v298 = vld [vmem:[#allocation16 + $0x178] sm:$0xff]
    %v299 = vld [vmem:[#allocation17] sm:$0xff]
    %v300 = vld [vmem:[#allocation17 + $0x8] sm:$0xff]
    %v301 = vld [vmem:[#allocation17 + $0x10] sm:$0xff]
    %v302 = vld [vmem:[#allocation17 + $0x18] sm:$0xff]
    %v303 = vld [vmem:[#allocation17 + $0x20] sm:$0xff]
    %v304 = vld [vmem:[#allocation17 + $0x28] sm:$0xff]
    %v305 = vld [vmem:[#allocation17 + $0x30] sm:$0xff]
    %v306 = vld [vmem:[#allocation17 + $0x38] sm:$0xff]
    %v307 = vld [vmem:[#allocation17 + $0x40] sm:$0xff]
    %v308 = vld [vmem:[#allocation17 + $0x48] sm:$0xff]
    %v309 = vld [vmem:[#allocation17 + $0x50] sm:$0xff]
    %v310 = vld [vmem:[#allocation17 + $0x58] sm:$0xff]
    %v311 = vld [vmem:[#allocation17 + $0x60] sm:$0xff]
    %v312 = vld [vmem:[#allocation17 + $0x68] sm:$0xff]
    %v313 = vld [vmem:[#allocation17 + $0x70] sm:$0xff]
    %v314 = vld [vmem:[#allocation17 + $0x78] sm:$0xff]
    %v315 = vld [vmem:[#allocation17 + $0x80] sm:$0xff]
    %v316 = vld [vmem:[#allocation17 + $0x88] sm:$0xff]
    %v317 = vld [vmem:[#allocation17 + $0x90] sm:$0xff]
    %v318 = vld [vmem:[#allocation17 + $0x98] sm:$0xff]
    %v319 = vld [vmem:[#allocation17 + $0xa0] sm:$0xff]
    %v320 = vld [vmem:[#allocation17 + $0xa8] sm:$0xff]
    %v321 = vld [vmem:[#allocation17 + $0xb0] sm:$0xff]
    %v322 = vld [vmem:[#allocation17 + $0xb8] sm:$0xff]
    %v323 = vld [vmem:[#allocation17 + $0xc0] sm:$0xff]
    %v324 = vld [vmem:[#allocation17 + $0xc8] sm:$0xff]
    %v325 = vld [vmem:[#allocation17 + $0xd0] sm:$0xff]
    %v326 = vld [vmem:[#allocation17 + $0xd8] sm:$0xff]
    %v327 = vld [vmem:[#allocation17 + $0xe0] sm:$0xff]
    %v328 = vld [vmem:[#allocation17 + $0xe8] sm:$0xff]
    %v329 = vld [vmem:[#allocation17 + $0xf0] sm:$0xff]
    %v330 = vld [vmem:[#allocation17 + $0xf8] sm:$0xff]
    %v331 = vld [vmem:[#allocation17 + $0x100] sm:$0xff]
    %v332 = vld [vmem:[#allocation17 + $0x108] sm:$0xff]
    %v333 = vld [vmem:[#allocation17 + $0x110] sm:$0xff]
    %v334 = vld [vmem:[#allocation17 + $0x118] sm:$0xff]
    %v335 = vld [vmem:[#allocation17 + $0x120] sm:$0xff]
    %v336 = vld [vmem:[#allocation17 + $0x128] sm:$0xff]
    %v337 = vld [vmem:[#allocation17 + $0x130] sm:$0xff]
    %v338 = vld [vmem:[#allocation17 + $0x138] sm:$0xff]
    %v339 = vld [vmem:[#allocation17 + $0x140] sm:$0xff]
    %v340 = vld [vmem:[#allocation17 + $0x148] sm:$0xff]
    %v341 = vld [vmem:[#allocation17 + $0x150] sm:$0xff]
    %v342 = vld [vmem:[#allocation17 + $0x158] sm:$0xff]
    %v343 = vld [vmem:[#allocation17 + $0x160] sm:$0xff]
    %v344 = vld [vmem:[#allocation17 + $0x168] sm:$0xff]
    %v345 = vld [vmem:[#allocation17 + $0x170] sm:$0xff]
    %v346 = vld [vmem:[#allocation17 + $0x178] sm:$0xff]
    %v347 = vld [vmem:[#allocation19] sm:$0xff]
    %v348 = vld [vmem:[#allocation19 + $0x8] sm:$0xff]
    %v349 = vld [vmem:[#allocation19 + $0x10] sm:$0xff]
    %v350 = vld [vmem:[#allocation19 + $0x18] sm:$0xff]
    %v351 = vld [vmem:[#allocation19 + $0x20] sm:$0xff]
    %v352 = vld [vmem:[#allocation19 + $0x28] sm:$0xff]
    %v353 = vld [vmem:[#allocation19 + $0x30] sm:$0xff]
    %v354 = vld [vmem:[#allocation19 + $0x38] sm:$0xff]
    %v355 = vld [vmem:[#allocation19 + $0x40] sm:$0xff]
    %v356 = vld [vmem:[#allocation19 + $0x48] sm:$0xff]
    %v357 = vld [vmem:[#allocation19 + $0x50] sm:$0xff]
    %v358 = vld [vmem:[#allocation19 + $0x58] sm:$0xff]
    %v359 = vld [vmem:[#allocation19 + $0x60] sm:$0xff]
    %v360 = vld [vmem:[#allocation19 + $0x68] sm:$0xff]
    %v361 = vld [vmem:[#allocation19 + $0x70] sm:$0xff]
    %v362 = vld [vmem:[#allocation19 + $0x78] sm:$0xff]
    %v363 = vld [vmem:[#allocation19 + $0x80] sm:$0xff]
    %v364 = vld [vmem:[#allocation19 + $0x88] sm:$0xff]
    %v365 = vld [vmem:[#allocation19 + $0x90] sm:$0xff]
    %v366 = vld [vmem:[#allocation19 + $0x98] sm:$0xff]
    %v367 = vld [vmem:[#allocation19 + $0xa0] sm:$0xff]
    %v368 = vld [vmem:[#allocation19 + $0xa8] sm:$0xff]
    %v369 = vld [vmem:[#allocation19 + $0xb0] sm:$0xff]
    %v370 = vld [vmem:[#allocation19 + $0xb8] sm:$0xff]
    %v371 = vld [vmem:[#allocation19 + $0xc0] sm:$0xff]
    %v372 = vld [vmem:[#allocation19 + $0xc8] sm:$0xff]
    %v373 = vld [vmem:[#allocation19 + $0xd0] sm:$0xff]
    %v374 = vld [vmem:[#allocation19 + $0xd8] sm:$0xff]
    %v375 = vld [vmem:[#allocation19 + $0xe0] sm:$0xff]
    %v376 = vld [vmem:[#allocation19 + $0xe8] sm:$0xff]
    %v377 = vld [vmem:[#allocation19 + $0xf0] sm:$0xff]
    %v378 = vld [vmem:[#allocation19 + $0xf8] sm:$0xff]
    %v379 = vld [vmem:[#allocation19 + $0x100] sm:$0xff]
    %v380 = vld [vmem:[#allocation19 + $0x108] sm:$0xff]
    %v381 = vld [vmem:[#allocation19 + $0x110] sm:$0xff]
    %v382 = vld [vmem:[#allocation19 + $0x118] sm:$0xff]
    %v383 = vld [vmem:[#allocation19 + $0x120] sm:$0xff]
    %v384 = vld [vmem:[#allocation19 + $0x128] sm:$0xff]
    %v385 = vld [vmem:[#allocation19 + $0x130] sm:$0xff]
    %v386 = vld [vmem:[#allocation19 + $0x138] sm:$0xff]
    %v387 = vld [vmem:[#allocation19 + $0x140] sm:$0xff]
    %v388 = vld [vmem:[#allocation19 + $0x148] sm:$0xff]
    %v389 = vld [vmem:[#allocation19 + $0x150] sm:$0xff]
    %v390 = vld [vmem:[#allocation19 + $0x158] sm:$0xff]
    %v391 = vld [vmem:[#allocation19 + $0x160] sm:$0xff]
    %v392 = vld [vmem:[#allocation19 + $0x168] sm:$0xff]
    %v393 = vld [vmem:[#allocation19 + $0x170] sm:$0xff]
    %v394 = vld [vmem:[#allocation19 + $0x178] sm:$0xff]
    %v395 = vld [vmem:[#allocation10] sm:$0x1]
    %v397 = vperm.slane %v395, 0
    %v399 = vld [vmem:[#allocation13] sm:$0x1]
    %v401 = vperm.slane %v399, 0
    %v403 = vld [vmem:[#allocation14] sm:$0x1]
    %v405 = vperm.slane %v403, 0
    %v407 = vld [vmem:[%s8] sm:$0x1]
    %v409 = vperm.slane %v407, 0
    %v411 = vld [vmem:[%s11] sm:$0x7]
    %v413 = vperm.slane %v411, 0
    %v414 = vperm.slane %v411, 1
    %v415 = vperm.slane %v411, 2
    %v419 = vld [vmem:[%s13] sm:$0x7]
    %v421 = vperm.slane %v419, 0
    %v422 = vperm.slane %v419, 1
    %v423 = vperm.slane %v419, 2
    %427 = vmatpush.msra.mxu0 %v234
    %428 = vmatpush.msra.mxu0 %v233
    %429 = vmatpush.msra.mxu0 %v232
    %430 = vmatpush.msra.mxu0 %v231
    %431 = vmatpush.msra.mxu0 %v230
    %432 = vmatpush.msra.mxu0 %v229
    %433 = vmatpush.msra.mxu0 %v228
    %434 = vmatpush.msra.mxu0 %v227
    %435 = vmatpush.msra.mxu0 %v226
    %436 = vmatpush.msra.mxu0 %v225
    %437 = vmatpush.msra.mxu0 %v224
    %438 = vmatpush.msra.mxu0 %v223
    %439 = vmatpush.msra.mxu0 %v222
    %440 = vmatpush.msra.mxu0 %v221
    %441 = vmatpush.msra.mxu0 %v220
    %442 = vmatpush.msra.mxu0 %v219
    %443 = vmatmul.f32.gmra.mxu0 %v217
    %v444 = vpop.f32.mrf.mxu0
    %v445 = vadd.f32 %v397, %v444
    %446 = vmatmul.f32.gmra.mxu0 %v218
    %v447 = vpop.f32.mrf.mxu0
    %v448 = vadd.f32 %v397, %v447
    %449 = vdwg.mxu0
    %450 = vmatpush.msra.mxu0 %v250
    %451 = vmatpush.msra.mxu0 %v249
    %452 = vmatpush.msra.mxu0 %v248
    %453 = vmatpush.msra.mxu0 %v247
    %454 = vmatpush.msra.mxu0 %v246
    %455 = vmatpush.msra.mxu0 %v245
    %456 = vmatpush.msra.mxu0 %v244
    %457 = vmatpush.msra.mxu0 %v243
    %458 = vmatpush.msra.mxu0 %v242
    %459 = vmatpush.msra.mxu0 %v241
    %460 = vmatpush.msra.mxu0 %v240
    %461 = vmatpush.msra.mxu0 %v239
    %462 = vmatpush.msra.mxu0 %v238
    %463 = vmatpush.msra.mxu0 %v237
    %464 = vmatpush.msra.mxu0 %v236
    %465 = vmatpush.msra.mxu0 %v235
    %466 = vmatmul.f32.gmra.mxu0 %v217
    %v467 = vpop.f32.mrf.mxu0
    %v468 = vadd.f32 %v401, %v467
    %469 = vmatmul.f32.gmra.mxu0 %v218
    %v470 = vpop.f32.mrf.mxu0
    %v471 = vadd.f32 %v401, %v470
    %472 = vdwg.mxu0
    %vm473 = vcmask 64512
    %v475 = vsel %vm473, %v213, 0
    %477 = vmatpush.msra.mxu0 0.0
    %478 = vmatpush.msra.mxu0 0.0
    %479 = vmatpush.msra.mxu0 0.0
    %480 = vmatpush.msra.mxu0 0.0
    %481 = vmatpush.msra.mxu0 0.0
    %482 = vmatpush.msra.mxu0 0.0
    %483 = vmatpush.msra.mxu0 0.0
    %484 = vmatpush.msra.mxu0 0.0
    %485 = vmatpush.msra.mxu0 0.0
    %486 = vmatpush.msra.mxu0 0.0
    %487 = vmatpush.msra.mxu0 0.0
    %488 = vmatpush.msra.mxu0 0.0
    %489 = vmatpush.msra.mxu0 0.0
    %490 = vmatpush.msra.mxu0 0.0
    %491 = vmatpush.msra.mxu0 0.0
    %492 = vmatpush.msra.mxu0 %v445
    %493 = vmatmul.f32.gmra.mxu0 %v475
    %v494 = vpop.f32.mrf.mxu0
    %v495 = vadd.f32 0.0, %v494
    %496 = vdwg.mxu0
    %v498 = vsel %vm473, %v214, 0
    %500 = vmatpush.msra.mxu0 0.0
    %501 = vmatpush.msra.mxu0 0.0
    %502 = vmatpush.msra.mxu0 0.0
    %503 = vmatpush.msra.mxu0 0.0
    %504 = vmatpush.msra.mxu0 0.0
    %505 = vmatpush.msra.mxu0 0.0
    %506 = vmatpush.msra.mxu0 0.0
    %507 = vmatpush.msra.mxu0 0.0
    %508 = vmatpush.msra.mxu0 0.0
    %509 = vmatpush.msra.mxu0 0.0
    %510 = vmatpush.msra.mxu0 0.0
    %511 = vmatpush.msra.mxu0 0.0
    %512 = vmatpush.msra.mxu0 0.0
    %513 = vmatpush.msra.mxu0 0.0
    %514 = vmatpush.msra.mxu0 0.0
    %515 = vmatpush.msra.mxu0 %v448
    %516 = vmatmul.f32.gmra.mxu0 %v498
    %v517 = vpop.f32.mrf.mxu0
    %v518 = vadd.f32 0.0, %v517
    %519 = vdwg.mxu0
    %v520 = vadd.f32 %v495, %v405
    %v521 = vadd.f32 %v518, %v405
    %v523 = vsel %vm473, %v215, 0
    %525 = vmatpush.msra.mxu0 0.0
    %526 = vmatpush.msra.mxu0 0.0
    %527 = vmatpush.msra.mxu0 0.0
    %528 = vmatpush.msra.mxu0 0.0
    %529 = vmatpush.msra.mxu0 0.0
    %530 = vmatpush.msra.mxu0 0.0
    %531 = vmatpush.msra.mxu0 0.0
    %532 = vmatpush.msra.mxu0 0.0
    %533 = vmatpush.msra.mxu0 0.0
    %534 = vmatpush.msra.mxu0 0.0
    %535 = vmatpush.msra.mxu0 0.0
    %536 = vmatpush.msra.mxu0 0.0
    %537 = vmatpush.msra.mxu0 0.0
    %538 = vmatpush.msra.mxu0 0.0
    %539 = vmatpush.msra.mxu0 0.0
    %540 = vmatpush.msra.mxu0 %v468
    %541 = vmatmul.f32.gmra.mxu0 %v523
    %v542 = vpop.f32.mrf.mxu0
    %v543 = vadd.f32 0.0, %v542
    %544 = vdwg.mxu0
    %v546 = vsel %vm473, %v216, 0
    %548 = vmatpush.msra.mxu0 0.0
    %549 = vmatpush.msra.mxu0 0.0
    %550 = vmatpush.msra.mxu0 0.0
    %551 = vmatpush.msra.mxu0 0.0
    %552 = vmatpush.msra.mxu0 0.0
    %553 = vmatpush.msra.mxu0 0.0
    %554 = vmatpush.msra.mxu0 0.0
    %555 = vmatpush.msra.mxu0 0.0
    %556 = vmatpush.msra.mxu0 0.0
    %557 = vmatpush.msra.mxu0 0.0
    %558 = vmatpush.msra.mxu0 0.0
    %559 = vmatpush.msra.mxu0 0.0
    %560 = vmatpush.msra.mxu0 0.0
    %561 = vmatpush.msra.mxu0 0.0
    %562 = vmatpush.msra.mxu0 0.0
    %563 = vmatpush.msra.mxu0 %v471
    %564 = vmatmul.f32.gmra.mxu0 %v546
    %v565 = vpop.f32.mrf.mxu0
    %v566 = vadd.f32 0.0, %v565
    %567 = vdwg.mxu0
    %v568 = vadd.f32 %v543, %v409
    %v569 = vadd.f32 %v566, %v409
    %570 = vmatpush.msra.mxu0 %v344
    %571 = vmatpush.msra.mxu0 %v341
    %572 = vmatpush.msra.mxu0 %v338
    %573 = vmatpush.msra.mxu0 %v335
    %574 = vmatpush.msra.mxu0 %v332
    %575 = vmatpush.msra.mxu0 %v329
    %576 = vmatpush.msra.mxu0 %v326
    %577 = vmatpush.msra.mxu0 %v323
    %578 = vmatpush.msra.mxu0 %v320
    %579 = vmatpush.msra.mxu0 %v317
    %580 = vmatpush.msra.mxu0 %v314
    %581 = vmatpush.msra.mxu0 %v311
    %582 = vmatpush.msra.mxu0 %v308
    %583 = vmatpush.msra.mxu0 %v305
    %584 = vmatpush.msra.mxu0 %v302
    %585 = vmatpush.msra.mxu0 %v299
    %586 = vmatmul.f32.gmra.mxu0 %v568
    %v587 = vpop.f32.mrf.mxu0
    %v588 = vadd.f32 0.0, %v587
    %589 = vmatmul.f32.gmra.mxu0 %v569
    %v590 = vpop.f32.mrf.mxu0
    %v591 = vadd.f32 0.0, %v590
    %592 = vdwg.mxu0
    %593 = vmatpush.msra.mxu0 %v345
    %594 = vmatpush.msra.mxu0 %v342
    %595 = vmatpush.msra.mxu0 %v339
    %596 = vmatpush.msra.mxu0 %v336
    %597 = vmatpush.msra.mxu0 %v333
    %598 = vmatpush.msra.mxu0 %v330
    %599 = vmatpush.msra.mxu0 %v327
    %600 = vmatpush.msra.mxu0 %v324
    %601 = vmatpush.msra.mxu0 %v321
    %602 = vmatpush.msra.mxu0 %v318
    %603 = vmatpush.msra.mxu0 %v315
    %604 = vmatpush.msra.mxu0 %v312
    %605 = vmatpush.msra.mxu0 %v309
    %606 = vmatpush.msra.mxu0 %v306
    %607 = vmatpush.msra.mxu0 %v303
    %608 = vmatpush.msra.mxu0 %v300
    %609 = vmatmul.f32.gmra.mxu0 %v568
    %v610 = vpop.f32.mrf.mxu0
    %v611 = vadd.f32 0.0, %v610
    %612 = vmatmul.f32.gmra.mxu0 %v569
    %v613 = vpop.f32.mrf.mxu0
    %v614 = vadd.f32 0.0, %v613
    %615 = vdwg.mxu0
    %616 = vmatpush.msra.mxu0 %v346
    %617 = vmatpush.msra.mxu0 %v343
    %618 = vmatpush.msra.mxu0 %v340
    %619 = vmatpush.msra.mxu0 %v337
    %620 = vmatpush.msra.mxu0 %v334
    %621 = vmatpush.msra.mxu0 %v331
    %622 = vmatpush.msra.mxu0 %v328
    %623 = vmatpush.msra.mxu0 %v325
    %624 = vmatpush.msra.mxu0 %v322
    %625 = vmatpush.msra.mxu0 %v319
    %626 = vmatpush.msra.mxu0 %v316
    %627 = vmatpush.msra.mxu0 %v313
    %628 = vmatpush.msra.mxu0 %v310
    %629 = vmatpush.msra.mxu0 %v307
    %630 = vmatpush.msra.mxu0 %v304
    %631 = vmatpush.msra.mxu0 %v301
    %632 = vmatmul.f32.gmra.mxu0 %v568
    %v633 = vpop.f32.mrf.mxu0
    %v634 = vadd.f32 0.0, %v633
    %635 = vmatmul.f32.gmra.mxu0 %v569
    %v636 = vpop.f32.mrf.mxu0
    %v637 = vadd.f32 0.0, %v636
    %638 = vdwg.mxu0
    %639 = vmatpush.msra.mxu0 %v296
    %640 = vmatpush.msra.mxu0 %v293
    %641 = vmatpush.msra.mxu0 %v290
    %642 = vmatpush.msra.mxu0 %v287
    %643 = vmatpush.msra.mxu0 %v284
    %644 = vmatpush.msra.mxu0 %v281
    %645 = vmatpush.msra.mxu0 %v278
    %646 = vmatpush.msra.mxu0 %v275
    %647 = vmatpush.msra.mxu0 %v272
    %648 = vmatpush.msra.mxu0 %v269
    %649 = vmatpush.msra.mxu0 %v266
    %650 = vmatpush.msra.mxu0 %v263
    %651 = vmatpush.msra.mxu0 %v260
    %652 = vmatpush.msra.mxu0 %v257
    %653 = vmatpush.msra.mxu0 %v254
    %654 = vmatpush.msra.mxu0 %v251
    %655 = vmatmul.f32.gmra.mxu0 %v520
    %v656 = vpop.f32.mrf.mxu0
    %v657 = vadd.f32 %v588, %v656
    %658 = vmatmul.f32.gmra.mxu0 %v521
    %v659 = vpop.f32.mrf.mxu0
    %v660 = vadd.f32 %v591, %v659
    %661 = vdwg.mxu0
    %662 = vmatpush.msra.mxu0 %v297
    %663 = vmatpush.msra.mxu0 %v294
    %664 = vmatpush.msra.mxu0 %v291
    %665 = vmatpush.msra.mxu0 %v288
    %666 = vmatpush.msra.mxu0 %v285
    %667 = vmatpush.msra.mxu0 %v282
    %668 = vmatpush.msra.mxu0 %v279
    %669 = vmatpush.msra.mxu0 %v276
    %670 = vmatpush.msra.mxu0 %v273
    %671 = vmatpush.msra.mxu0 %v270
    %672 = vmatpush.msra.mxu0 %v267
    %673 = vmatpush.msra.mxu0 %v264
    %674 = vmatpush.msra.mxu0 %v261
    %675 = vmatpush.msra.mxu0 %v258
    %676 = vmatpush.msra.mxu0 %v255
    %677 = vmatpush.msra.mxu0 %v252
    %678 = vmatmul.f32.gmra.mxu0 %v520
    %v679 = vpop.f32.mrf.mxu0
    %v680 = vadd.f32 %v611, %v679
    %681 = vmatmul.f32.gmra.mxu0 %v521
    %v682 = vpop.f32.mrf.mxu0
    %v683 = vadd.f32 %v614, %v682
    %684 = vdwg.mxu0
    %685 = vmatpush.msra.mxu0 %v298
    %686 = vmatpush.msra.mxu0 %v295
    %687 = vmatpush.msra.mxu0 %v292
    %688 = vmatpush.msra.mxu0 %v289
    %689 = vmatpush.msra.mxu0 %v286
    %690 = vmatpush.msra.mxu0 %v283
    %691 = vmatpush.msra.mxu0 %v280
    %692 = vmatpush.msra.mxu0 %v277
    %693 = vmatpush.msra.mxu0 %v274
    %694 = vmatpush.msra.mxu0 %v271
    %695 = vmatpush.msra.mxu0 %v268
    %696 = vmatpush.msra.mxu0 %v265
    %697 = vmatpush.msra.mxu0 %v262
    %698 = vmatpush.msra.mxu0 %v259
    %699 = vmatpush.msra.mxu0 %v256
    %700 = vmatpush.msra.mxu0 %v253
    %701 = vmatmul.f32.gmra.mxu0 %v520
    %v702 = vpop.f32.mrf.mxu0
    %v703 = vadd.f32 %v634, %v702
    %704 = vmatmul.f32.gmra.mxu0 %v521
    %v705 = vpop.f32.mrf.mxu0
    %v706 = vadd.f32 %v637, %v705
    %707 = vdwg.mxu0
    %v708 = vadd.f32 %v657, %v413
    %v709 = vadd.f32 %v680, %v414
    %v710 = vadd.f32 %v703, %v415
    %v711 = vadd.f32 %v660, %v413
    %v712 = vadd.f32 %v683, %v414
    %v713 = vadd.f32 %v706, %v415
    %714 = vmatpush.msra.mxu0 %v392
    %715 = vmatpush.msra.mxu0 %v389
    %716 = vmatpush.msra.mxu0 %v386
    %717 = vmatpush.msra.mxu0 %v383
    %718 = vmatpush.msra.mxu0 %v380
    %719 = vmatpush.msra.mxu0 %v377
    %720 = vmatpush.msra.mxu0 %v374
    %721 = vmatpush.msra.mxu0 %v371
    %722 = vmatpush.msra.mxu0 %v368
    %723 = vmatpush.msra.mxu0 %v365
    %724 = vmatpush.msra.mxu0 %v362
    %725 = vmatpush.msra.mxu0 %v359
    %726 = vmatpush.msra.mxu0 %v356
    %727 = vmatpush.msra.mxu0 %v353
    %728 = vmatpush.msra.mxu0 %v350
    %729 = vmatpush.msra.mxu0 %v347
    %730 = vmatmul.f32.gmra.mxu0 %v217
    %v731 = vpop.f32.mrf.mxu0
    %v732 = vadd.f32 %v421, %v731
    %733 = vmatmul.f32.gmra.mxu0 %v218
    %v734 = vpop.f32.mrf.mxu0
    %v735 = vadd.f32 %v421, %v734
    %736 = vdwg.mxu0
    %737 = vmatpush.msra.mxu0 %v393
    %738 = vmatpush.msra.mxu0 %v390
    %739 = vmatpush.msra.mxu0 %v387
    %740 = vmatpush.msra.mxu0 %v384
    %741 = vmatpush.msra.mxu0 %v381
    %742 = vmatpush.msra.mxu0 %v378
    %743 = vmatpush.msra.mxu0 %v375
    %744 = vmatpush.msra.mxu0 %v372
    %745 = vmatpush.msra.mxu0 %v369
    %746 = vmatpush.msra.mxu0 %v366
    %747 = vmatpush.msra.mxu0 %v363
    %748 = vmatpush.msra.mxu0 %v360
    %749 = vmatpush.msra.mxu0 %v357
    %750 = vmatpush.msra.mxu0 %v354
    %751 = vmatpush.msra.mxu0 %v351
    %752 = vmatpush.msra.mxu0 %v348
    %753 = vmatmul.f32.gmra.mxu0 %v217
    %v754 = vpop.f32.mrf.mxu0
    %v755 = vadd.f32 %v422, %v754
    %756 = vmatmul.f32.gmra.mxu0 %v218
    %v757 = vpop.f32.mrf.mxu0
    %v758 = vadd.f32 %v422, %v757
    %759 = vdwg.mxu0
    %760 = vmatpush.msra.mxu0 %v394
    %761 = vmatpush.msra.mxu0 %v391
    %762 = vmatpush.msra.mxu0 %v388
    %763 = vmatpush.msra.mxu0 %v385
    %764 = vmatpush.msra.mxu0 %v382
    %765 = vmatpush.msra.mxu0 %v379
    %766 = vmatpush.msra.mxu0 %v376
    %767 = vmatpush.msra.mxu0 %v373
    %768 = vmatpush.msra.mxu0 %v370
    %769 = vmatpush.msra.mxu0 %v367
    %770 = vmatpush.msra.mxu0 %v364
    %771 = vmatpush.msra.mxu0 %v361
    %772 = vmatpush.msra.mxu0 %v358
    %773 = vmatpush.msra.mxu0 %v355
    %774 = vmatpush.msra.mxu0 %v352
    %775 = vmatpush.msra.mxu0 %v349
    %776 = vmatmul.f32.gmra.mxu0 %v217
    %v777 = vpop.f32.mrf.mxu0
    %v778 = vadd.f32 %v423, %v777
    %779 = vmatmul.f32.gmra.mxu0 %v218
    %v780 = vpop.f32.mrf.mxu0
    %v781 = vadd.f32 %v423, %v780
    %782 = vdwg.mxu0
    %v783 = vadd.f32 %v708, %v732
    %v784 = vadd.f32 %v711, %v735
    %v785 = vxor.u32 %v783, 2147483648
    %v786 = vxor.u32 %v784, 2147483648
    %v787 = vmul.f32 %v785, 1.442695
    %v788 = vpow.pop %v787
    %v789 = vmul.f32 %v786, 1.442695
    %v790 = vpow.pop %v789
    %v791 = vadd.f32 %v788, 1.0
    %v792 = vadd.f32 %v790, 1.0
    %v793 = vrcp.pop %v791
    %v794 = vmul.f32 %v791, %v793
    %v795 = vsub.f32 1.0, %v794
    %v796 = vmul.f32 %v793, %v795
    %v797 = vadd.f32 %v793, %v796
    %vm798 = vweird.f32 %v791
    %vm799 = vweird.f32 %v793
    %vm800 = vmor %vm798, %vm799
    %v801 = vsel %vm800, %v793, %v797
    %v802 = vand.u32 2147483647, %v791
    %vm803 = vcmp.eq.f32.partialorder %v802, 8.507059e+37
    %v804 = vand.u32 %v791, 2147483648
    %v805 = vor.u32 1.1754944e-38, %v804
    %v806 = vsel %vm803, %v805, %v801
    %v807 = vmul.f32 1.0, %v806
    %v808 = vrcp.pop %v792
    %v809 = vmul.f32 %v792, %v808
    %v810 = vsub.f32 1.0, %v809
    %v811 = vmul.f32 %v808, %v810
    %v812 = vadd.f32 %v808, %v811
    %vm813 = vweird.f32 %v792
    %vm814 = vweird.f32 %v808
    %vm815 = vmor %vm813, %vm814
    %v816 = vsel %vm815, %v808, %v812
    %v817 = vand.u32 2147483647, %v792
    %vm818 = vcmp.eq.f32.partialorder %v817, 8.507059e+37
    %v819 = vand.u32 %v792, 2147483648
    %v820 = vor.u32 1.1754944e-38, %v819
    %v821 = vsel %vm818, %v820, %v816
    %v822 = vmul.f32 1.0, %v821
    %v823 = vadd.f32 %v709, %v755
    %v824 = vadd.f32 %v712, %v758
    %v825 = vxor.u32 %v823, 2147483648
    %v826 = vxor.u32 %v824, 2147483648
    %v827 = vmul.f32 %v825, 1.442695
    %v828 = vpow.pop %v827
    %v829 = vmul.f32 %v826, 1.442695
    %v830 = vpow.pop %v829
    %v831 = vadd.f32 %v828, 1.0
    %v832 = vadd.f32 %v830, 1.0
    %v833 = vrcp.pop %v831
    %v834 = vmul.f32 %v831, %v833
    %v835 = vsub.f32 1.0, %v834
    %v836 = vmul.f32 %v833, %v835
    %v837 = vadd.f32 %v833, %v836
    %vm838 = vweird.f32 %v831
    %vm839 = vweird.f32 %v833
    %vm840 = vmor %vm838, %vm839
    %v841 = vsel %vm840, %v833, %v837
    %v842 = vand.u32 2147483647, %v831
    %vm843 = vcmp.eq.f32.partialorder %v842, 8.507059e+37
    %v844 = vand.u32 %v831, 2147483648
    %v845 = vor.u32 1.1754944e-38, %v844
    %v846 = vsel %vm843, %v845, %v841
    %v847 = vmul.f32 1.0, %v846
    %v848 = vrcp.pop %v832
    %v849 = vmul.f32 %v832, %v848
    %v850 = vsub.f32 1.0, %v849
    %v851 = vmul.f32 %v848, %v850
    %v852 = vadd.f32 %v848, %v851
    %vm853 = vweird.f32 %v832
    %vm854 = vweird.f32 %v848
    %vm855 = vmor %vm853, %vm854
    %v856 = vsel %vm855, %v848, %v852
    %v857 = vand.u32 2147483647, %v832
    %vm858 = vcmp.eq.f32.partialorder %v857, 8.507059e+37
    %v859 = vand.u32 %v832, 2147483648
    %v860 = vor.u32 1.1754944e-38, %v859
    %v861 = vsel %vm858, %v860, %v856
    %v862 = vmul.f32 1.0, %v861
    %v863 = vmul.f32 %v807, %v778
    %v864 = vmul.f32 %v822, %v781
    %v865 = vadd.f32 %v710, %v863
    %v866 = vadd.f32 %v713, %v864
    %v867 = vtanh.pop %v865
    %v868 = vtanh.pop %v866
    %v869 = vsub.f32 %v217, %v867
    %v870 = vsub.f32 %v218, %v868
    %v871 = vmul.f32 %v847, %v869
    %v872 = vmul.f32 %v862, %v870
    %v873 = vadd.f32 %v867, %v871
    %v874 = vadd.f32 %v868, %v872
    %875 = vmatpush.msra.mxu0 %v234
    %876 = vmatpush.msra.mxu0 %v233
    %877 = vmatpush.msra.mxu0 %v232
    %878 = vmatpush.msra.mxu0 %v231
    %879 = vmatpush.msra.mxu0 %v230
    %880 = vmatpush.msra.mxu0 %v229
    %881 = vmatpush.msra.mxu0 %v228
    %882 = vmatpush.msra.mxu0 %v227
    %883 = vmatpush.msra.mxu0 %v226
    %884 = vmatpush.msra.mxu0 %v225
    %885 = vmatpush.msra.mxu0 %v224
    %886 = vmatpush.msra.mxu0 %v223
    %887 = vmatpush.msra.mxu0 %v222
    %888 = vmatpush.msra.mxu0 %v221
    %889 = vmatpush.msra.mxu0 %v220
    %890 = vmatpush.msra.mxu0 %v219
    %891 = vmatmul.f32.gmra.mxu0 %v873
    %v892 = vpop.f32.mrf.mxu0
    %v893 = vadd.f32 %v397, %v892
    %894 = vmatmul.f32.gmra.mxu0 %v874
    %v895 = vpop.f32.mrf.mxu0
    %v896 = vadd.f32 %v397, %v895
    %897 = vdwg.mxu0
    %898 = vmatpush.msra.mxu0 %v250
    %899 = vmatpush.msra.mxu0 %v249
    %900 = vmatpush.msra.mxu0 %v248
    %901 = vmatpush.msra.mxu0 %v247
    %902 = vmatpush.msra.mxu0 %v246
    %903 = vmatpush.msra.mxu0 %v245
    %904 = vmatpush.msra.mxu0 %v244
    %905 = vmatpush.msra.mxu0 %v243
    %906 = vmatpush.msra.mxu0 %v242
    %907 = vmatpush.msra.mxu0 %v241
    %908 = vmatpush.msra.mxu0 %v240
    %909 = vmatpush.msra.mxu0 %v239
    %910 = vmatpush.msra.mxu0 %v238
    %911 = vmatpush.msra.mxu0 %v237
    %912 = vmatpush.msra.mxu0 %v236
    %913 = vmatpush.msra.mxu0 %v235
    %914 = vmatmul.f32.gmra.mxu0 %v873
    %v915 = vpop.f32.mrf.mxu0
    %v916 = vadd.f32 %v401, %v915
    %917 = vmatmul.f32.gmra.mxu0 %v874
    %v918 = vpop.f32.mrf.mxu0
    %v919 = vadd.f32 %v401, %v918
    %920 = vdwg.mxu0
    %921 = vmatpush.msra.mxu0 0.0
    %922 = vmatpush.msra.mxu0 0.0
    %923 = vmatpush.msra.mxu0 0.0
    %924 = vmatpush.msra.mxu0 0.0
    %925 = vmatpush.msra.mxu0 0.0
    %926 = vmatpush.msra.mxu0 0.0
    %927 = vmatpush.msra.mxu0 0.0
    %928 = vmatpush.msra.mxu0 0.0
    %929 = vmatpush.msra.mxu0 0.0
    %930 = vmatpush.msra.mxu0 0.0
    %931 = vmatpush.msra.mxu0 0.0
    %932 = vmatpush.msra.mxu0 0.0
    %933 = vmatpush.msra.mxu0 0.0
    %934 = vmatpush.msra.mxu0 0.0
    %935 = vmatpush.msra.mxu0 0.0
    %936 = vmatpush.msra.mxu0 %v893
    %937 = vmatmul.f32.gmra.mxu0 %v475
    %v938 = vpop.f32.mrf.mxu0
    %v939 = vadd.f32 0.0, %v938
    %940 = vdwg.mxu0
    %941 = vmatpush.msra.mxu0 0.0
    %942 = vmatpush.msra.mxu0 0.0
    %943 = vmatpush.msra.mxu0 0.0
    %944 = vmatpush.msra.mxu0 0.0
    %945 = vmatpush.msra.mxu0 0.0
    %946 = vmatpush.msra.mxu0 0.0
    %947 = vmatpush.msra.mxu0 0.0
    %948 = vmatpush.msra.mxu0 0.0
    %949 = vmatpush.msra.mxu0 0.0
    %950 = vmatpush.msra.mxu0 0.0
    %951 = vmatpush.msra.mxu0 0.0
    %952 = vmatpush.msra.mxu0 0.0
    %953 = vmatpush.msra.mxu0 0.0
    %954 = vmatpush.msra.mxu0 0.0
    %955 = vmatpush.msra.mxu0 0.0
    %956 = vmatpush.msra.mxu0 %v896
    %957 = vmatmul.f32.gmra.mxu0 %v498
    %v958 = vpop.f32.mrf.mxu0
    %v959 = vadd.f32 0.0, %v958
    %960 = vdwg.mxu0
    %v961 = vadd.f32 %v939, %v405
    %v962 = vadd.f32 %v959, %v405
    %963 = vmatpush.msra.mxu0 0.0
    %964 = vmatpush.msra.mxu0 0.0
    %965 = vmatpush.msra.mxu0 0.0
    %966 = vmatpush.msra.mxu0 0.0
    %967 = vmatpush.msra.mxu0 0.0
    %968 = vmatpush.msra.mxu0 0.0
    %969 = vmatpush.msra.mxu0 0.0
    %970 = vmatpush.msra.mxu0 0.0
    %971 = vmatpush.msra.mxu0 0.0
    %972 = vmatpush.msra.mxu0 0.0
    %973 = vmatpush.msra.mxu0 0.0
    %974 = vmatpush.msra.mxu0 0.0
    %975 = vmatpush.msra.mxu0 0.0
    %976 = vmatpush.msra.mxu0 0.0
    %977 = vmatpush.msra.mxu0 0.0
    %978 = vmatpush.msra.mxu0 %v916
    %979 = vmatmul.f32.gmra.mxu0 %v523
    %v980 = vpop.f32.mrf.mxu0
    %v981 = vadd.f32 0.0, %v980
    %982 = vdwg.mxu0
    %983 = vmatpush.msra.mxu0 0.0
    %984 = vmatpush.msra.mxu0 0.0
    %985 = vmatpush.msra.mxu0 0.0
    %986 = vmatpush.msra.mxu0 0.0
    %987 = vmatpush.msra.mxu0 0.0
    %988 = vmatpush.msra.mxu0 0.0
    %989 = vmatpush.msra.mxu0 0.0
    %990 = vmatpush.msra.mxu0 0.0
    %991 = vmatpush.msra.mxu0 0.0
    %992 = vmatpush.msra.mxu0 0.0
    %993 = vmatpush.msra.mxu0 0.0
    %994 = vmatpush.msra.mxu0 0.0
    %995 = vmatpush.msra.mxu0 0.0
    %996 = vmatpush.msra.mxu0 0.0
    %997 = vmatpush.msra.mxu0 0.0
    %998 = vmatpush.msra.mxu0 %v919
    %999 = vmatmul.f32.gmra.mxu0 %v546
    %v1000 = vpop.f32.mrf.mxu0
    %v1001 = vadd.f32 0.0, %v1000
    %1002 = vdwg.mxu0
    %v1003 = vadd.f32 %v981, %v409
    %v1004 = vadd.f32 %v1001, %v409
    %1005 = vmatpush.msra.mxu0 %v344
    %1006 = vmatpush.msra.mxu0 %v341
    %1007 = vmatpush.msra.mxu0 %v338
    %1008 = vmatpush.msra.mxu0 %v335
    %1009 = vmatpush.msra.mxu0 %v332
    %1010 = vmatpush.msra.mxu0 %v329
    %1011 = vmatpush.msra.mxu0 %v326
    %1012 = vmatpush.msra.mxu0 %v323
    %1013 = vmatpush.msra.mxu0 %v320
    %1014 = vmatpush.msra.mxu0 %v317
    %1015 = vmatpush.msra.mxu0 %v314
    %1016 = vmatpush.msra.mxu0 %v311
    %1017 = vmatpush.msra.mxu0 %v308
    %1018 = vmatpush.msra.mxu0 %v305
    %1019 = vmatpush.msra.mxu0 %v302
    %1020 = vmatpush.msra.mxu0 %v299
    %1021 = vmatmul.f32.gmra.mxu0 %v1003
    %v1022 = vpop.f32.mrf.mxu0
    %v1023 = vadd.f32 0.0, %v1022
    %1024 = vmatmul.f32.gmra.mxu0 %v1004
    %v1025 = vpop.f32.mrf.mxu0
    %v1026 = vadd.f32 0.0, %v1025
    %1027 = vdwg.mxu0
    %1028 = vmatpush.msra.mxu0 %v345
    %1029 = vmatpush.msra.mxu0 %v342
    %1030 = vmatpush.msra.mxu0 %v339
    %1031 = vmatpush.msra.mxu0 %v336
    %1032 = vmatpush.msra.mxu0 %v333
    %1033 = vmatpush.msra.mxu0 %v330
    %1034 = vmatpush.msra.mxu0 %v327
    %1035 = vmatpush.msra.mxu0 %v324
    %1036 = vmatpush.msra.mxu0 %v321
    %1037 = vmatpush.msra.mxu0 %v318
    %1038 = vmatpush.msra.mxu0 %v315
    %1039 = vmatpush.msra.mxu0 %v312
    %1040 = vmatpush.msra.mxu0 %v309
    %1041 = vmatpush.msra.mxu0 %v306
    %1042 = vmatpush.msra.mxu0 %v303
    %1043 = vmatpush.msra.mxu0 %v300
    %1044 = vmatmul.f32.gmra.mxu0 %v1003
    %v1045 = vpop.f32.mrf.mxu0
    %v1046 = vadd.f32 0.0, %v1045
    %1047 = vmatmul.f32.gmra.mxu0 %v1004
    %v1048 = vpop.f32.mrf.mxu0
    %v1049 = vadd.f32 0.0, %v1048
    %1050 = vdwg.mxu0
    %1051 = vmatpush.msra.mxu0 %v346
    %1052 = vmatpush.msra.mxu0 %v343
    %1053 = vmatpush.msra.mxu0 %v340
    %1054 = vmatpush.msra.mxu0 %v337
    %1055 = vmatpush.msra.mxu0 %v334
    %1056 = vmatpush.msra.mxu0 %v331
    %1057 = vmatpush.msra.mxu0 %v328
    %1058 = vmatpush.msra.mxu0 %v325
    %1059 = vmatpush.msra.mxu0 %v322
    %1060 = vmatpush.msra.mxu0 %v319
    %1061 = vmatpush.msra.mxu0 %v316
    %1062 = vmatpush.msra.mxu0 %v313
    %1063 = vmatpush.msra.mxu0 %v310
    %1064 = vmatpush.msra.mxu0 %v307
    %1065 = vmatpush.msra.mxu0 %v304
    %1066 = vmatpush.msra.mxu0 %v301
    %1067 = vmatmul.f32.gmra.mxu0 %v1003
    %v1068 = vpop.f32.mrf.mxu0
    %v1069 = vadd.f32 0.0, %v1068
    %1070 = vmatmul.f32.gmra.mxu0 %v1004
    %v1071 = vpop.f32.mrf.mxu0
    %v1072 = vadd.f32 0.0, %v1071
    %1073 = vdwg.mxu0
    %1074 = vmatpush.msra.mxu0 %v296
    %1075 = vmatpush.msra.mxu0 %v293
    %1076 = vmatpush.msra.mxu0 %v290
    %1077 = vmatpush.msra.mxu0 %v287
    %1078 = vmatpush.msra.mxu0 %v284
    %1079 = vmatpush.msra.mxu0 %v281
    %1080 = vmatpush.msra.mxu0 %v278
    %1081 = vmatpush.msra.mxu0 %v275
    %1082 = vmatpush.msra.mxu0 %v272
    %1083 = vmatpush.msra.mxu0 %v269
    %1084 = vmatpush.msra.mxu0 %v266
    %1085 = vmatpush.msra.mxu0 %v263
    %1086 = vmatpush.msra.mxu0 %v260
    %1087 = vmatpush.msra.mxu0 %v257
    %1088 = vmatpush.msra.mxu0 %v254
    %1089 = vmatpush.msra.mxu0 %v251
    %1090 = vmatmul.f32.gmra.mxu0 %v961
    %v1091 = vpop.f32.mrf.mxu0
    %v1092 = vadd.f32 %v1023, %v1091
    %1093 = vmatmul.f32.gmra.mxu0 %v962
    %v1094 = vpop.f32.mrf.mxu0
    %v1095 = vadd.f32 %v1026, %v1094
    %1096 = vdwg.mxu0
    %1097 = vmatpush.msra.mxu0 %v297
    %1098 = vmatpush.msra.mxu0 %v294
    %1099 = vmatpush.msra.mxu0 %v291
    %1100 = vmatpush.msra.mxu0 %v288
    %1101 = vmatpush.msra.mxu0 %v285
    %1102 = vmatpush.msra.mxu0 %v282
    %1103 = vmatpush.msra.mxu0 %v279
    %1104 = vmatpush.msra.mxu0 %v276
    %1105 = vmatpush.msra.mxu0 %v273
    %1106 = vmatpush.msra.mxu0 %v270
    %1107 = vmatpush.msra.mxu0 %v267
    %1108 = vmatpush.msra.mxu0 %v264
    %1109 = vmatpush.msra.mxu0 %v261
    %1110 = vmatpush.msra.mxu0 %v258
    %1111 = vmatpush.msra.mxu0 %v255
    %1112 = vmatpush.msra.mxu0 %v252
    %1113 = vmatmul.f32.gmra.mxu0 %v961
    %v1114 = vpop.f32.mrf.mxu0
    %v1115 = vadd.f32 %v1046, %v1114
    %1116 = vmatmul.f32.gmra.mxu0 %v962
    %v1117 = vpop.f32.mrf.mxu0
    %v1118 = vadd.f32 %v1049, %v1117
    %1119 = vdwg.mxu0
    %1120 = vmatpush.msra.mxu0 %v298
    %1121 = vmatpush.msra.mxu0 %v295
    %1122 = vmatpush.msra.mxu0 %v292
    %1123 = vmatpush.msra.mxu0 %v289
    %1124 = vmatpush.msra.mxu0 %v286
    %1125 = vmatpush.msra.mxu0 %v283
    %1126 = vmatpush.msra.mxu0 %v280
    %1127 = vmatpush.msra.mxu0 %v277
    %1128 = vmatpush.msra.mxu0 %v274
    %1129 = vmatpush.msra.mxu0 %v271
    %1130 = vmatpush.msra.mxu0 %v268
    %1131 = vmatpush.msra.mxu0 %v265
    %1132 = vmatpush.msra.mxu0 %v262
    %1133 = vmatpush.msra.mxu0 %v259
    %1134 = vmatpush.msra.mxu0 %v256
    %1135 = vmatpush.msra.mxu0 %v253
    %1136 = vmatmul.f32.gmra.mxu0 %v961
    %v1137 = vpop.f32.mrf.mxu0
    %v1138 = vadd.f32 %v1069, %v1137
    %1139 = vmatmul.f32.gmra.mxu0 %v962
    %v1140 = vpop.f32.mrf.mxu0
    %v1141 = vadd.f32 %v1072, %v1140
    %1142 = vdwg.mxu0
    %v1143 = vadd.f32 %v1092, %v413
    %v1144 = vadd.f32 %v1115, %v414
    %v1145 = vadd.f32 %v1138, %v415
    %v1146 = vadd.f32 %v1095, %v413
    %v1147 = vadd.f32 %v1118, %v414
    %v1148 = vadd.f32 %v1141, %v415
    %1149 = vmatpush.msra.mxu0 %v392
    %1150 = vmatpush.msra.mxu0 %v389
    %1151 = vmatpush.msra.mxu0 %v386
    %1152 = vmatpush.msra.mxu0 %v383
    %1153 = vmatpush.msra.mxu0 %v380
    %1154 = vmatpush.msra.mxu0 %v377
    %1155 = vmatpush.msra.mxu0 %v374
    %1156 = vmatpush.msra.mxu0 %v371
    %1157 = vmatpush.msra.mxu0 %v368
    %1158 = vmatpush.msra.mxu0 %v365
    %1159 = vmatpush.msra.mxu0 %v362
    %1160 = vmatpush.msra.mxu0 %v359
    %1161 = vmatpush.msra.mxu0 %v356
    %1162 = vmatpush.msra.mxu0 %v353
    %1163 = vmatpush.msra.mxu0 %v350
    %1164 = vmatpush.msra.mxu0 %v347
    %1165 = vmatmul.f32.gmra.mxu0 %v873
    %v1166 = vpop.f32.mrf.mxu0
    %v1167 = vadd.f32 %v421, %v1166
    %1168 = vmatmul.f32.gmra.mxu0 %v874
    %v1169 = vpop.f32.mrf.mxu0
    %v1170 = vadd.f32 %v421, %v1169
    %1171 = vdwg.mxu0
    %1172 = vmatpush.msra.mxu0 %v393
    %1173 = vmatpush.msra.mxu0 %v390
    %1174 = vmatpush.msra.mxu0 %v387
    %1175 = vmatpush.msra.mxu0 %v384
    %1176 = vmatpush.msra.mxu0 %v381
    %1177 = vmatpush.msra.mxu0 %v378
    %1178 = vmatpush.msra.mxu0 %v375
    %1179 = vmatpush.msra.mxu0 %v372
    %1180 = vmatpush.msra.mxu0 %v369
    %1181 = vmatpush.msra.mxu0 %v366
    %1182 = vmatpush.msra.mxu0 %v363
    %1183 = vmatpush.msra.mxu0 %v360
    %1184 = vmatpush.msra.mxu0 %v357
    %1185 = vmatpush.msra.mxu0 %v354
    %1186 = vmatpush.msra.mxu0 %v351
    %1187 = vmatpush.msra.mxu0 %v348
    %1188 = vmatmul.f32.gmra.mxu0 %v873
    %v1189 = vpop.f32.mrf.mxu0
    %v1190 = vadd.f32 %v422, %v1189
    %1191 = vmatmul.f32.gmra.mxu0 %v874
    %v1192 = vpop.f32.mrf.mxu0
    %v1193 = vadd.f32 %v422, %v1192
    %1194 = vdwg.mxu0
    %1195 = vmatpush.msra.mxu0 %v394
    %1196 = vmatpush.msra.mxu0 %v391
    %1197 = vmatpush.msra.mxu0 %v388
    %1198 = vmatpush.msra.mxu0 %v385
    %1199 = vmatpush.msra.mxu0 %v382
    %1200 = vmatpush.msra.mxu0 %v379
    %1201 = vmatpush.msra.mxu0 %v376
    %1202 = vmatpush.msra.mxu0 %v373
    %1203 = vmatpush.msra.mxu0 %v370
    %1204 = vmatpush.msra.mxu0 %v367
    %1205 = vmatpush.msra.mxu0 %v364
    %1206 = vmatpush.msra.mxu0 %v361
    %1207 = vmatpush.msra.mxu0 %v358
    %1208 = vmatpush.msra.mxu0 %v355
    %1209 = vmatpush.msra.mxu0 %v352
    %1210 = vmatpush.msra.mxu0 %v349
    %1211 = vmatmul.f32.gmra.mxu0 %v873
    %v1212 = vpop.f32.mrf.mxu0
    %v1213 = vadd.f32 %v423, %v1212
    %1214 = vmatmul.f32.gmra.mxu0 %v874
    %v1215 = vpop.f32.mrf.mxu0
    %v1216 = vadd.f32 %v423, %v1215
    %1217 = vdwg.mxu0
    %v1218 = vadd.f32 %v1143, %v1167
    %v1219 = vadd.f32 %v1146, %v1170
    %v1220 = vxor.u32 %v1218, 2147483648
    %v1221 = vxor.u32 %v1219, 2147483648
    %v1222 = vmul.f32 %v1220, 1.442695
    %v1223 = vpow.pop %v1222
    %v1224 = vmul.f32 %v1221, 1.442695
    %v1225 = vpow.pop %v1224
    %v1226 = vadd.f32 %v1223, 1.0
    %v1227 = vadd.f32 %v1225, 1.0
    %v1228 = vrcp.pop %v1226
    %v1229 = vmul.f32 %v1226, %v1228
    %v1230 = vsub.f32 1.0, %v1229
    %v1231 = vmul.f32 %v1228, %v1230
    %v1232 = vadd.f32 %v1228, %v1231
    %vm1233 = vweird.f32 %v1226
    %vm1234 = vweird.f32 %v1228
    %vm1235 = vmor %vm1233, %vm1234
    %v1236 = vsel %vm1235, %v1228, %v1232
    %v1237 = vand.u32 2147483647, %v1226
    %vm1238 = vcmp.eq.f32.partialorder %v1237, 8.507059e+37
    %v1239 = vand.u32 %v1226, 2147483648
    %v1240 = vor.u32 1.1754944e-38, %v1239
    %v1241 = vsel %vm1238, %v1240, %v1236
    %v1242 = vmul.f32 1.0, %v1241
    %v1243 = vrcp.pop %v1227
    %v1244 = vmul.f32 %v1227, %v1243
    %v1245 = vsub.f32 1.0, %v1244
    %v1246 = vmul.f32 %v1243, %v1245
    %v1247 = vadd.f32 %v1243, %v1246
    %vm1248 = vweird.f32 %v1227
    %vm1249 = vweird.f32 %v1243
    %vm1250 = vmor %vm1248, %vm1249
    %v1251 = vsel %vm1250, %v1243, %v1247
    %v1252 = vand.u32 2147483647, %v1227
    %vm1253 = vcmp.eq.f32.partialorder %v1252, 8.507059e+37
    %v1254 = vand.u32 %v1227, 2147483648
    %v1255 = vor.u32 1.1754944e-38, %v1254
    %v1256 = vsel %vm1253, %v1255, %v1251
    %v1257 = vmul.f32 1.0, %v1256
    %v1258 = vadd.f32 %v1144, %v1190
    %v1259 = vadd.f32 %v1147, %v1193
    %v1260 = vxor.u32 %v1258, 2147483648
    %v1261 = vxor.u32 %v1259, 2147483648
    %v1262 = vmul.f32 %v1260, 1.442695
    %v1263 = vpow.pop %v1262
    %v1264 = vmul.f32 %v1261, 1.442695
    %v1265 = vpow.pop %v1264
    %v1266 = vadd.f32 %v1263, 1.0
    %v1267 = vadd.f32 %v1265, 1.0
    %v1268 = vrcp.pop %v1266
    %v1269 = vmul.f32 %v1266, %v1268
    %v1270 = vsub.f32 1.0, %v1269
    %v1271 = vmul.f32 %v1268, %v1270
    %v1272 = vadd.f32 %v1268, %v1271
    %vm1273 = vweird.f32 %v1266
    %vm1274 = vweird.f32 %v1268
    %vm1275 = vmor %vm1273, %vm1274
    %v1276 = vsel %vm1275, %v1268, %v1272
    %v1277 = vand.u32 2147483647, %v1266
    %vm1278 = vcmp.eq.f32.partialorder %v1277, 8.507059e+37
    %v1279 = vand.u32 %v1266, 2147483648
    %v1280 = vor.u32 1.1754944e-38, %v1279
    %v1281 = vsel %vm1278, %v1280, %v1276
    %v1282 = vmul.f32 1.0, %v1281
    %v1283 = vrcp.pop %v1267
    %v1284 = vmul.f32 %v1267, %v1283
    %v1285 = vsub.f32 1.0, %v1284
    %v1286 = vmul.f32 %v1283, %v1285
    %v1287 = vadd.f32 %v1283, %v1286
    %vm1288 = vweird.f32 %v1267
    %vm1289 = vweird.f32 %v1283
    %vm1290 = vmor %vm1288, %vm1289
    %v1291 = vsel %vm1290, %v1283, %v1287
    %v1292 = vand.u32 2147483647, %v1267
    %vm1293 = vcmp.eq.f32.partialorder %v1292, 8.507059e+37
    %v1294 = vand.u32 %v1267, 2147483648
    %v1295 = vor.u32 1.1754944e-38, %v1294
    %v1296 = vsel %vm1293, %v1295, %v1291
    %v1297 = vmul.f32 1.0, %v1296
    %v1298 = vmul.f32 %v1242, %v1213
    %v1299 = vmul.f32 %v1257, %v1216
    %v1300 = vadd.f32 %v1145, %v1298
    %v1301 = vadd.f32 %v1148, %v1299
    %v1302 = vtanh.pop %v1300
    %v1303 = vtanh.pop %v1301
    %v1304 = vsub.f32 %v873, %v1302
    %v1305 = vsub.f32 %v874, %v1303
    %v1306 = vmul.f32 %v1282, %v1304
    %v1307 = vmul.f32 %v1297, %v1305
    %v1308 = vadd.f32 %v1302, %v1306
    %v1309 = vadd.f32 %v1303, %v1307
    %1310 = vst [vmem:[#allocation20] sm:$0xff] %v1308
    %1311 = vst [vmem:[#allocation20 + $0x8] sm:$0xff] %v1309
    // Predicated region
    $region102: #{tpu_custom_call.1} parent=1 // pred_check
      _
    $region103: #{tpu_custom_call.1} parent=1 // pred_check_branch
      %1313 = sbr.rel (0) target = $region105
    $region104: #{tpu_custom_call.1} parent=1 // pred_region
      %1315 = vsyncadd [#allocation4], 0
      %s1316 = sshll.u32 [#allocation20], 4
      %s1317 = int_to_ptr.vmem [resolvable:$true] %s1316
      %s1318 = sshll.u32 %s14, 4
      %s1319 = int_to_ptr.hbm [resolvable:$true] %s1318
      %1324 = dma.vmem_to_hbm [thread:$0]  %s1317, 256, %s1319, [#allocation4], 128, 128, 8
    $region105: #{tpu_custom_call.1} parent=1 // pred_fallthru
      _
    // Predicated region
    $region106: #{tpu_custom_call.1} parent=1 // pred_check
      _
    $region107: #{tpu_custom_call.1} parent=1 // pred_check_branch
      %1326 = sbr.rel (0) target = $region109
    $region108: #{tpu_custom_call.1} parent=1 // pred_region
      %1328 = dma.done [#allocation4], 256
    $region109: #{tpu_custom_call.1} parent=1 // pred_fallthru
      _
    %1329 = vsyncpa [#allocation3], 1
    %1330 = vsyncpa [#allocation6], 1
    %1331 = vsyncpa [#allocation9], 1
    %1332 = vsyncpa [#allocation12], 1
    %1333 = vsyncpa [#allocation15], 1
    %1334 = vsyncpa [#allocation18], 1
    %1335 = vsyncpa [#allocation4], 1

</llo_original>
